<compile_context>
chip_gen: v7x
topology: tpu7x:2x2x1
jax: 0.10.0
libtpu: 0.0.40
codegen_flags: <defaults>
</compile_context>

<pallas_src>
import math
from functools import partial

import jax
import jax.numpy as jnp
from jax.experimental import pallas as pl
from jax.experimental.pallas import tpu as pltpu

HIDDEN = 256  # fixed by the PyTorch module


def _make_kernel(act_dtype):
    def kernel(s_ref, a_ref,
               w1s_ref, w1a_ref, b1_ref,
               w2_ref, b2_ref,
               w5_ref, b5_ref,
               wout_ref, bout_ref,
               out_ref):
        h = HIDDEN

        s = s_ref[...].astype(jnp.bfloat16)
        a = a_ref[...].astype(jnp.bfloat16)

        # ---- fused fc1 | fc3 : concat folded into two dots, f32 MXU accum ----
        y = (jnp.dot(s, w1s_ref[...], preferred_element_type=jnp.float32)
             + jnp.dot(a, w1a_ref[...], preferred_element_type=jnp.float32))
        y = jnp.maximum(y.astype(act_dtype) + b1_ref[...].astype(act_dtype), 0.0)

        h1 = y[:, :h].astype(jnp.bfloat16)     # head 1 (lane-aligned slice)
        h2 = y[:, h:].astype(jnp.bfloat16)     # head 2

        # ---- fc2 / fc4 ----
        z1 = jnp.dot(h1, w2_ref[...], preferred_element_type=jnp.float32)
        z2 = jnp.dot(h2, w5_ref[...], preferred_element_type=jnp.float32)
        z1 = jnp.maximum(z1.astype(act_dtype) + b2_ref[...].astype(act_dtype), 0.0)
        z2 = jnp.maximum(z2.astype(act_dtype) + b5_ref[...].astype(act_dtype), 0.0)

        # ---- output1 / output2 on the MXU: block-diagonal (512, 2) projection ----
        hcat = jnp.concatenate(
            [z1.astype(jnp.bfloat16), z2.astype(jnp.bfloat16)], axis=-1)   # (bm, 512)
        q = jnp.dot(hcat, wout_ref[...],
                    preferred_element_type=jnp.float32) + bout_ref[...]     # (bm, 2)

        # single lane-packed (bm, 2) write -> one store
        out_ref[...] = q.astype(out_ref.dtype)

    return kernel


def _round_up(n, m):
    return ((n + m - 1) // m) * m


def _default_act_dtype():
    """bf16 elementwise on bf16-native VPUs (v6e / v7x), f32 otherwise (v5e)."""
    try:
        kind = jax.devices()[0].device_kind.lower()
    except Exception:
        return jnp.float32
    if any(t in kind for t in ("v2", "v3", "v4", "v5")):
        return jnp.float32
    return jnp.bfloat16


@partial(jax.jit, static_argnames=("act_dtype", "single_buffer_weights"))
def _critic_forward_impl(states, actions, packed_params, act_dtype,
                         single_buffer_weights):
    (w1s, w1a, b1f, w2, b2, w5, b5, w_out, b_out) = packed_params
    states = states.astype(jnp.float32)
    actions = actions.astype(jnp.float32)
    B, S = states.shape
    A = actions.shape[1]

    # Batch tiling:
    #   B <= 256        : one block (nothing to split)
    #   256 < B <= 2048 : two tiles -> both v7x TensorCores get work
    #   B > 2048        : 1024-row tiles (per-step MXU work hides the ~0.35 us
    #                     grid overhead; live VMEM stays < ~8 MiB, safe on
    #                     v5e's 16 MiB scoped default and v7x's 32 MiB)
    if B <= 256:
        bm = _round_up(B, 8)
    elif B <= 2048:
        bm = _round_up(-(-B // 2), 8)
    else:
        bm = 1024
    Bp = _round_up(B, bm)
    if Bp != B:
        pad = Bp - B
        states = jnp.pad(states, ((0, pad), (0, 0)))
        actions = jnp.pad(actions, ((0, pad), (0, 0)))

    grid = (Bp // bm,)

    def _row_spec(cols):
        return pl.BlockSpec((bm, cols), lambda i: (i, 0))

    def _const_spec(shape):
        idx = lambda i: (0,) * len(shape)
        if single_buffer_weights:
            # Block index never changes across the grid -> no second buffer.
            return pl.BlockSpec(shape, idx, pipeline_mode=pl.Buffered(1))
        return pl.BlockSpec(shape, idx)

    weights = (w1s, w1a, b1f, w2, b2, w5, b5, w_out, b_out)
    in_specs = [_row_spec(S), _row_spec(A)] + [_const_spec(w.shape) for w in weights]
    out_specs = _row_spec(2)

    D = S + A
    flops = 2 * Bp * (D * 2 * HIDDEN + 2 * HIDDEN * HIDDEN + 2 * HIDDEN * 2)
    bytes_accessed = (states.size * 4 + actions.size * 4 + Bp * 2 * 4
                      + sum(int(w.size) * w.dtype.itemsize for w in weights))

    q = pl.pallas_call(
        _make_kernel(act_dtype),
        out_shape=jax.ShapeDtypeStruct((Bp, 2), jnp.float32),
        grid_spec=pltpu.PrefetchScalarGridSpec(
            num_scalar_prefetch=0,
            grid=grid,
            in_specs=in_specs,
            out_specs=out_specs,
        ),
        compiler_params=pltpu.CompilerParams(
            dimension_semantics=("parallel",)),
        cost_estimate=pl.CostEstimate(
            flops=flops, transcendentals=0, bytes_accessed=bytes_accessed),
    )(states, actions, *weights)

    q = q[:B]
    return q[:, 0:1], q[:, 1:2]


def critic_forward(states, actions, packed_params, act_dtype=None):
    """Returns (q1, q2), each (B, 1) float32, matching the PyTorch module."""
    if act_dtype is None:
        act_dtype = _default_act_dtype()
    try:
        return _critic_forward_impl(states, actions, packed_params, act_dtype, True)
    except Exception:
        # TODO(synk): pl.Buffered(1) not accepted on this jax build; fall back
        # to default double-buffered weight specs (correctness unchanged).
        return _critic_forward_impl(states, actions, packed_params, act_dtype, False)


def init_critic_params(key, state_dim, action_dim, hidden=HIDDEN):
    """torch.nn.Linear default U(-1/sqrt(fan_in), ...) init.

    Weights stored transposed vs PyTorch: (in_features, out_features), f32.
    """
    d_in = state_dim + action_dim
    layer_dims = [(d_in, hidden), (hidden, hidden), (hidden, 1),   # net1
                  (d_in, hidden), (hidden, hidden), (hidden, 1)]   # net2
    params = []
    keys = jax.random.split(key, 2 * len(layer_dims))
    for i, (fan_in, fan_out) in enumerate(layer_dims):
        bound = 1.0 / math.sqrt(fan_in)
        w = jax.random.uniform(keys[2 * i], (fan_in, fan_out),
                               minval=-bound, maxval=bound, dtype=jnp.float32)
        b = jax.random.uniform(keys[2 * i + 1], (1, fan_out),
                               minval=-bound, maxval=bound, dtype=jnp.float32)
        params.extend([w, b])
    return tuple(params)


def pack_critic_params(params, state_dim):
    """One-time repack for the kernel:
    * fuse the two heads' first layers into one (D, 512) weight,
    * split layer-1 weights by (states | actions) so the concat folds away,
    * pack the two (256, 1) output layers into a block-diagonal (512, 2)
      weight (MXU epilogue) and a (1, 2) fused bias,
    * cast all MXU weights to bf16 (f32 accumulation in-kernel)."""
    (w1, b1, w2, b2, w3, b3, w4, b4, w5, b5, w6, b6) = params
    w1f = jnp.concatenate([w1, w4], axis=1)                     # (D, 512)
    b1f = jnp.concatenate([b1, b4], axis=1)                     # (1, 512) f32
    w1s = w1f[:state_dim].astype(jnp.bfloat16)                  # (S, 512) bf16
    w1a = w1f[state_dim:].astype(jnp.bfloat16)                  # (A, 512) bf16
    z = jnp.zeros_like(w3)                                      # (256, 1)
    w_out = jnp.concatenate(
        [jnp.concatenate([w3, z], axis=1),
         jnp.concatenate([z, w6], axis=1)], axis=0).astype(jnp.bfloat16)   # (512, 2)
    b_out = jnp.concatenate([b3, b6], axis=1)                   # (1, 2) f32
    return (w1s, w1a, b1f,
            w2.astype(jnp.bfloat16), b2,
            w5.astype(jnp.bfloat16), b5,
            w_out, b_out)


def _reference_forward(states, actions, params):
    """Plain-JAX f32 reference matching the PyTorch module."""
    x = jnp.concatenate([states, actions], axis=-1).astype(jnp.float32)
    (w1, b1, w2, b2, w3, b3, w4, b4, w5, b5, w6, b6) = params

    def mlp(x, wa, ba, wb, bb, wc, bc):
        h = jnp.maximum(x @ wa + ba, 0.0)
        h = jnp.maximum(h @ wb + bb, 0.0)
        return h @ wc + bc

    return mlp(x, w1, b1, w2, b2, w3, b3), mlp(x, w4, b4, w5, b5, w6, b6)


if __name__ == "__main__":
    key = jax.random.PRNGKey(0)
    k_params, k_s, k_a = jax.random.split(key, 3)

    batch = 8
    state_dim = 24
    action_dim = 8

    params = init_critic_params(k_params, state_dim, action_dim)
    packed = pack_critic_params(params, state_dim)

    states = jax.random.normal(k_s, (batch, state_dim), dtype=jnp.float32)
    actions = jax.random.normal(k_a, (batch, action_dim), dtype=jnp.float32)

    q1, q2 = critic_forward(states, actions, packed)
    jax.block_until_ready((q1, q2))

    # sanity check vs the f32 reference (tolerance loosened for bf16 MXU path)
    r1, r2 = _reference_forward(states, actions, params)
    assert q1.shape == (batch, 1) and q2.shape == (batch, 1)
    assert jnp.allclose(q1, r1, atol=3e-2, rtol=3e-2), float(jnp.max(jnp.abs(q1 - r1)))
    assert jnp.allclose(q2, r2, atol=3e-2, rtol=3e-2), float(jnp.max(jnp.abs(q2 - r2)))

    # exercise the multi-tile (grid > 1) path + padding once as well
    k_s2, k_a2 = jax.random.split(k_s)
    states2 = jax.random.normal(k_s2, (384, state_dim), dtype=jnp.float32)
    actions2 = jax.random.normal(k_a2, (384, action_dim), dtype=jnp.float32)
    p1, p2 = critic_forward(states2, actions2, packed)
    jax.block_until_ready((p1, p2))
    s1, s2 = _reference_forward(states2, actions2, params)
    assert p1.shape == (384, 1) and p2.shape == (384, 1)
    assert jnp.allclose(p1, s1, atol=3e-2, rtol=3e-2), float(jnp.max(jnp.abs(p1 - s1)))
    assert jnp.allclose(p2, s2, atol=3e-2, rtol=3e-2), float(jnp.max(jnp.abs(p2 - s2)))

    print("KERNEL_OK")
</pallas_src>

<mosaic_0001>
module attributes {stable_mosaic.version = 11 : i64} {
  func.func @kernel(%arg0: i32, %arg1: memref<8x24xf32, #tpu.memory_space<vmem>>, %arg2: memref<8x8xf32, #tpu.memory_space<vmem>>, %arg3: memref<24x512xbf16, #tpu.memory_space<vmem>>, %arg4: memref<8x512xbf16, #tpu.memory_space<vmem>>, %arg5: memref<1x512xf32, #tpu.memory_space<vmem>>, %arg6: memref<256x256xbf16, #tpu.memory_space<vmem>>, %arg7: memref<1x256xf32, #tpu.memory_space<vmem>>, %arg8: memref<256x256xbf16, #tpu.memory_space<vmem>>, %arg9: memref<1x256xf32, #tpu.memory_space<vmem>>, %arg10: memref<512x2xbf16, #tpu.memory_space<vmem>>, %arg11: memref<1x2xf32, #tpu.memory_space<vmem>>, %arg12: memref<8x2xf32, #tpu.memory_space<vmem>>) attributes {dimension_semantics = [#tpu.dimension_semantics<parallel>], iteration_bounds = array<i64: 1>, scalar_prefetch = 0 : i64, scratch_operands = 0 : i64, tpu.core_type = #tpu.core_type<tc>, window_params = [{transform_indices = @transform_0, window_bounds = array<i64: 8, 24>}, {transform_indices = @transform_1, window_bounds = array<i64: 8, 8>}, {pipeline_mode = #tpu.pipeline_mode<synchronous>, transform_indices = @transform_2, window_bounds = array<i64: 24, 512>}, {pipeline_mode = #tpu.pipeline_mode<synchronous>, transform_indices = @transform_3, window_bounds = array<i64: 8, 512>}, {pipeline_mode = #tpu.pipeline_mode<synchronous>, transform_indices = @transform_4, window_bounds = array<i64: 1, 512>}, {pipeline_mode = #tpu.pipeline_mode<synchronous>, transform_indices = @transform_5, window_bounds = array<i64: 256, 256>}, {pipeline_mode = #tpu.pipeline_mode<synchronous>, transform_indices = @transform_6, window_bounds = array<i64: 1, 256>}, {pipeline_mode = #tpu.pipeline_mode<synchronous>, transform_indices = @transform_7, window_bounds = array<i64: 256, 256>}, {pipeline_mode = #tpu.pipeline_mode<synchronous>, transform_indices = @transform_8, window_bounds = array<i64: 1, 256>}, {pipeline_mode = #tpu.pipeline_mode<synchronous>, transform_indices = @transform_9, window_bounds = array<i64: 512, 2>}, {pipeline_mode = #tpu.pipeline_mode<synchronous>, transform_indices = @transform_10, window_bounds = array<i64: 1, 2>}, {transform_indices = @transform_11, window_bounds = array<i64: 8, 2>}]} {
    %c0 = arith.constant 0 : index
    %c0_0 = arith.constant 0 : index
    %0 = vector.load %arg1[%c0, %c0_0] : memref<8x24xf32, #tpu.memory_space<vmem>>, vector<8x24xf32>
    %1 = arith.truncf %0 : vector<8x24xf32> to vector<8x24xbf16>
    %c0_1 = arith.constant 0 : index
    %c0_2 = arith.constant 0 : index
    %2 = vector.load %arg2[%c0_1, %c0_2] : memref<8x8xf32, #tpu.memory_space<vmem>>, vector<8x8xf32>
    %3 = arith.truncf %2 : vector<8x8xf32> to vector<8x8xbf16>
    %c0_3 = arith.constant 0 : index
    %c0_4 = arith.constant 0 : index
    %4 = vector.load %arg3[%c0_3, %c0_4] : memref<24x512xbf16, #tpu.memory_space<vmem>>, vector<24x512xbf16>
    %cst = arith.constant dense<0.000000e+00> : vector<8x512xf32>
    %5 = tpu.matmul %1, %4, %cst {dimension_numbers = #tpu.dot_dimension_numbers<[1], [0], [0], [1], [0, 0, 1, 1], [], []>} : vector<8x24xbf16>, vector<24x512xbf16>, vector<8x512xf32> -> vector<8x512xf32>
    %c0_5 = arith.constant 0 : index
    %c0_6 = arith.constant 0 : index
    %6 = vector.load %arg4[%c0_5, %c0_6] : memref<8x512xbf16, #tpu.memory_space<vmem>>, vector<8x512xbf16>
    %cst_7 = arith.constant dense<0.000000e+00> : vector<8x512xf32>
    %7 = tpu.matmul %3, %6, %cst_7 {dimension_numbers = #tpu.dot_dimension_numbers<[1], [0], [0], [1], [0, 0, 1, 1], [], []>} : vector<8x8xbf16>, vector<8x512xbf16>, vector<8x512xf32> -> vector<8x512xf32>
    %8 = arith.addf %5, %7 : vector<8x512xf32>
    %9 = arith.truncf %8 : vector<8x512xf32> to vector<8x512xbf16>
    %c0_8 = arith.constant 0 : index
    %c0_9 = arith.constant 0 : index
    %10 = vector.load %arg5[%c0_8, %c0_9] : memref<1x512xf32, #tpu.memory_space<vmem>>, vector<1x512xf32>
    %11 = arith.truncf %10 : vector<1x512xf32> to vector<1x512xbf16>
    %12 = vector.broadcast %11 : vector<1x512xbf16> to vector<8x512xbf16>
    %13 = arith.addf %9, %12 : vector<8x512xbf16>
    %cst_10 = arith.constant 0.000000e+00 : bf16
    %14 = vector.broadcast %cst_10 : bf16 to vector<8x512xbf16>
    %15 = arith.maximumf %13, %14 : vector<8x512xbf16>
    %16 = vector.extract_strided_slice %15 {offsets = [0, 0], sizes = [8, 256], strides = [1, 1]} : vector<8x512xbf16> to vector<8x256xbf16>
    %17 = vector.extract_strided_slice %15 {offsets = [0, 256], sizes = [8, 256], strides = [1, 1]} : vector<8x512xbf16> to vector<8x256xbf16>
    %c0_11 = arith.constant 0 : index
    %c0_12 = arith.constant 0 : index
    %18 = vector.load %arg6[%c0_11, %c0_12] : memref<256x256xbf16, #tpu.memory_space<vmem>>, vector<256x256xbf16>
    %cst_13 = arith.constant dense<0.000000e+00> : vector<8x256xf32>
    %19 = tpu.matmul %16, %18, %cst_13 {dimension_numbers = #tpu.dot_dimension_numbers<[1], [0], [0], [1], [0, 0, 1, 1], [], []>} : vector<8x256xbf16>, vector<256x256xbf16>, vector<8x256xf32> -> vector<8x256xf32>
    %c0_14 = arith.constant 0 : index
    %c0_15 = arith.constant 0 : index
    %20 = vector.load %arg8[%c0_14, %c0_15] : memref<256x256xbf16, #tpu.memory_space<vmem>>, vector<256x256xbf16>
    %cst_16 = arith.constant dense<0.000000e+00> : vector<8x256xf32>
    %21 = tpu.matmul %17, %20, %cst_16 {dimension_numbers = #tpu.dot_dimension_numbers<[1], [0], [0], [1], [0, 0, 1, 1], [], []>} : vector<8x256xbf16>, vector<256x256xbf16>, vector<8x256xf32> -> vector<8x256xf32>
    %22 = arith.truncf %19 : vector<8x256xf32> to vector<8x256xbf16>
    %c0_17 = arith.constant 0 : index
    %c0_18 = arith.constant 0 : index
    %23 = vector.load %arg7[%c0_17, %c0_18] : memref<1x256xf32, #tpu.memory_space<vmem>>, vector<1x256xf32>
    %24 = arith.truncf %23 : vector<1x256xf32> to vector<1x256xbf16>
    %25 = vector.broadcast %24 : vector<1x256xbf16> to vector<8x256xbf16>
    %26 = arith.addf %22, %25 : vector<8x256xbf16>
    %cst_19 = arith.constant 0.000000e+00 : bf16
    %27 = vector.broadcast %cst_19 : bf16 to vector<8x256xbf16>
    %28 = arith.maximumf %26, %27 : vector<8x256xbf16>
    %29 = arith.truncf %21 : vector<8x256xf32> to vector<8x256xbf16>
    %c0_20 = arith.constant 0 : index
    %c0_21 = arith.constant 0 : index
    %30 = vector.load %arg9[%c0_20, %c0_21] : memref<1x256xf32, #tpu.memory_space<vmem>>, vector<1x256xf32>
    %31 = arith.truncf %30 : vector<1x256xf32> to vector<1x256xbf16>
    %32 = vector.broadcast %31 : vector<1x256xbf16> to vector<8x256xbf16>
    %33 = arith.addf %29, %32 : vector<8x256xbf16>
    %cst_22 = arith.constant 0.000000e+00 : bf16
    %34 = vector.broadcast %cst_22 : bf16 to vector<8x256xbf16>
    %35 = arith.maximumf %33, %34 : vector<8x256xbf16>
    %36 = tpu.concatenate %28, %35 in 1 : vector<8x256xbf16>, vector<8x256xbf16> -> vector<8x512xbf16>
    %c0_23 = arith.constant 0 : index
    %c0_24 = arith.constant 0 : index
    %37 = vector.load %arg10[%c0_23, %c0_24] : memref<512x2xbf16, #tpu.memory_space<vmem>>, vector<512x2xbf16>
    %cst_25 = arith.constant dense<0.000000e+00> : vector<8x2xf32>
    %38 = tpu.matmul %36, %37, %cst_25 {dimension_numbers = #tpu.dot_dimension_numbers<[1], [0], [0], [1], [0, 0, 1, 1], [], []>} : vector<8x512xbf16>, vector<512x2xbf16>, vector<8x2xf32> -> vector<8x2xf32>
    %c0_26 = arith.constant 0 : index
    %c0_27 = arith.constant 0 : index
    %39 = vector.load %arg11[%c0_26, %c0_27] : memref<1x2xf32, #tpu.memory_space<vmem>>, vector<1x2xf32>
    %40 = vector.broadcast %39 : vector<1x2xf32> to vector<8x2xf32>
    %41 = arith.addf %38, %40 : vector<8x2xf32>
    %c0_28 = arith.constant 0 : index
    %c0_29 = arith.constant 0 : index
    %42 = vector.load %arg12[%c0_28, %c0_29] : memref<8x2xf32, #tpu.memory_space<vmem>>, vector<8x2xf32>
    tpu.vector_store %arg12[%c0_28, %c0_29], %41 {strides = array<i32>} : memref<8x2xf32, #tpu.memory_space<vmem>>, vector<8x2xf32>,
    return
  }
  func.func @transform_0(%arg0: i32) -> (i32, i32) {
    %c0_i32 = arith.constant 0 : i32
    %c0_i32_0 = arith.constant 0 : i32
    return %arg0, %c0_i32 : i32, i32
  }
  func.func @transform_1(%arg0: i32) -> (i32, i32) {
    %c0_i32 = arith.constant 0 : i32
    %c0_i32_0 = arith.constant 0 : i32
    return %arg0, %c0_i32 : i32, i32
  }
  func.func @transform_2(%arg0: i32) -> (i32, i32) {
    %c0_i32 = arith.constant 0 : i32
    %c0_i32_0 = arith.constant 0 : i32
    %c0_i32_1 = arith.constant 0 : i32
    return %c0_i32, %c0_i32_0 : i32, i32
  }
  func.func @transform_3(%arg0: i32) -> (i32, i32) {
    %c0_i32 = arith.constant 0 : i32
    %c0_i32_0 = arith.constant 0 : i32
    %c0_i32_1 = arith.constant 0 : i32
    return %c0_i32, %c0_i32_0 : i32, i32
  }
  func.func @transform_4(%arg0: i32) -> (i32, i32) {
    %c0_i32 = arith.constant 0 : i32
    %c0_i32_0 = arith.constant 0 : i32
    %c0_i32_1 = arith.constant 0 : i32
    return %c0_i32, %c0_i32_0 : i32, i32
  }
  func.func @transform_5(%arg0: i32) -> (i32, i32) {
    %c0_i32 = arith.constant 0 : i32
    %c0_i32_0 = arith.constant 0 : i32
    %c0_i32_1 = arith.constant 0 : i32
    return %c0_i32, %c0_i32_0 : i32, i32
  }
  func.func @transform_6(%arg0: i32) -> (i32, i32) {
    %c0_i32 = arith.constant 0 : i32
    %c0_i32_0 = arith.constant 0 : i32
    %c0_i32_1 = arith.constant 0 : i32
    return %c0_i32, %c0_i32_0 : i32, i32
  }
  func.func @transform_7(%arg0: i32) -> (i32, i32) {
    %c0_i32 = arith.constant 0 : i32
    %c0_i32_0 = arith.constant 0 : i32
    %c0_i32_1 = arith.constant 0 : i32
    return %c0_i32, %c0_i32_0 : i32, i32
  }
  func.func @transform_8(%arg0: i32) -> (i32, i32) {
    %c0_i32 = arith.constant 0 : i32
    %c0_i32_0 = arith.constant 0 : i32
    %c0_i32_1 = arith.constant 0 : i32
    return %c0_i32, %c0_i32_0 : i32, i32
  }
  func.func @transform_9(%arg0: i32) -> (i32, i32) {
    %c0_i32 = arith.constant 0 : i32
    %c0_i32_0 = arith.constant 0 : i32
    %c0_i32_1 = arith.constant 0 : i32
    return %c0_i32, %c0_i32_0 : i32, i32
  }
  func.func @transform_10(%arg0: i32) -> (i32, i32) {
    %c0_i32 = arith.constant 0 : i32
    %c0_i32_0 = arith.constant 0 : i32
    %c0_i32_1 = arith.constant 0 : i32
    return %c0_i32, %c0_i32_0 : i32, i32
  }
  func.func @transform_11(%arg0: i32) -> (i32, i32) {
    %c0_i32 = arith.constant 0 : i32
    %c0_i32_0 = arith.constant 0 : i32
    return %arg0, %c0_i32 : i32, i32
  }
}

module attributes {stable_mosaic.version = 11 : i64} {
  func.func @kernel(%arg0: i32, %arg1: memref<8x24xf32, #tpu.memory_space<vmem>>, %arg2: memref<8x8xf32, #tpu.memory_space<vmem>>, %arg3: memref<24x512xbf16, #tpu.memory_space<vmem>>, %arg4: memref<8x512xbf16, #tpu.memory_space<vmem>>, %arg5: memref<1x512xf32, #tpu.memory_space<vmem>>, %arg6: memref<256x256xbf16, #tpu.memory_space<vmem>>, %arg7: memref<1x256xf32, #tpu.memory_space<vmem>>, %arg8: memref<256x256xbf16, #tpu.memory_space<vmem>>, %arg9: memref<1x256xf32, #tpu.memory_space<vmem>>, %arg10: memref<512x2xbf16, #tpu.memory_space<vmem>>, %arg11: memref<1x2xf32, #tpu.memory_space<vmem>>, %arg12: memref<8x2xf32, #tpu.memory_space<vmem>>) attributes {dimension_semantics = [#tpu.dimension_semantics<parallel>], iteration_bounds = array<i64: 1>, scalar_prefetch = 0 : i64, scratch_operands = 0 : i64, tpu.core_type = #tpu.core_type<tc>, window_params = [{transform_indices = @transform_0, window_bounds = array<i64: 8, 24>}, {transform_indices = @transform_1, window_bounds = array<i64: 8, 8>}, {pipeline_mode = #tpu.pipeline_mode<synchronous>, transform_indices = @transform_2, window_bounds = array<i64: 24, 512>}, {pipeline_mode = #tpu.pipeline_mode<synchronous>, transform_indices = @transform_3, window_bounds = array<i64: 8, 512>}, {pipeline_mode = #tpu.pipeline_mode<synchronous>, transform_indices = @transform_4, window_bounds = array<i64: 1, 512>}, {pipeline_mode = #tpu.pipeline_mode<synchronous>, transform_indices = @transform_5, window_bounds = array<i64: 256, 256>}, {pipeline_mode = #tpu.pipeline_mode<synchronous>, transform_indices = @transform_6, window_bounds = array<i64: 1, 256>}, {pipeline_mode = #tpu.pipeline_mode<synchronous>, transform_indices = @transform_7, window_bounds = array<i64: 256, 256>}, {pipeline_mode = #tpu.pipeline_mode<synchronous>, transform_indices = @transform_8, window_bounds = array<i64: 1, 256>}, {pipeline_mode = #tpu.pipeline_mode<synchronous>, transform_indices = @transform_9, window_bounds = array<i64: 512, 2>}, {pipeline_mode = #tpu.pipeline_mode<synchronous>, transform_indices = @transform_10, window_bounds = array<i64: 1, 2>}, {transform_indices = @transform_11, window_bounds = array<i64: 8, 2>}]} {
    %c0 = arith.constant 0 : index
    %c0_0 = arith.constant 0 : index
    %0 = vector.load %arg1[%c0, %c0_0] : memref<8x24xf32, #tpu.memory_space<vmem>>, vector<8x24xf32>
    %1 = arith.truncf %0 : vector<8x24xf32> to vector<8x24xbf16>
    %c0_1 = arith.constant 0 : index
    %c0_2 = arith.constant 0 : index
    %2 = vector.load %arg2[%c0_1, %c0_2] : memref<8x8xf32, #tpu.memory_space<vmem>>, vector<8x8xf32>
    %3 = arith.truncf %2 : vector<8x8xf32> to vector<8x8xbf16>
    %c0_3 = arith.constant 0 : index
    %c0_4 = arith.constant 0 : index
    %4 = vector.load %arg3[%c0_3, %c0_4] : memref<24x512xbf16, #tpu.memory_space<vmem>>, vector<24x512xbf16>
    %cst = arith.constant dense<0.000000e+00> : vector<8x512xf32>
    %5 = tpu.matmul %1, %4, %cst {dimension_numbers = #tpu.dot_dimension_numbers<[1], [0], [0], [1], [0, 0, 1, 1], [], []>} : vector<8x24xbf16>, vector<24x512xbf16>, vector<8x512xf32> -> vector<8x512xf32>
    %c0_5 = arith.constant 0 : index
    %c0_6 = arith.constant 0 : index
    %6 = vector.load %arg4[%c0_5, %c0_6] : memref<8x512xbf16, #tpu.memory_space<vmem>>, vector<8x512xbf16>
    %cst_7 = arith.constant dense<0.000000e+00> : vector<8x512xf32>
    %7 = tpu.matmul %3, %6, %cst_7 {dimension_numbers = #tpu.dot_dimension_numbers<[1], [0], [0], [1], [0, 0, 1, 1], [], []>} : vector<8x8xbf16>, vector<8x512xbf16>, vector<8x512xf32> -> vector<8x512xf32>
    %8 = arith.addf %5, %7 : vector<8x512xf32>
    %9 = arith.truncf %8 : vector<8x512xf32> to vector<8x512xbf16>
    %c0_8 = arith.constant 0 : index
    %c0_9 = arith.constant 0 : index
    %10 = vector.load %arg5[%c0_8, %c0_9] : memref<1x512xf32, #tpu.memory_space<vmem>>, vector<1x512xf32>
    %11 = arith.truncf %10 : vector<1x512xf32> to vector<1x512xbf16>
    %12 = vector.broadcast %11 : vector<1x512xbf16> to vector<8x512xbf16>
    %13 = arith.addf %9, %12 : vector<8x512xbf16>
    %cst_10 = arith.constant 0.000000e+00 : bf16
    %14 = vector.broadcast %cst_10 : bf16 to vector<8x512xbf16>
    %15 = arith.maximumf %13, %14 : vector<8x512xbf16>
    %16 = vector.extract_strided_slice %15 {offsets = [0, 0], sizes = [8, 256], strides = [1, 1]} : vector<8x512xbf16> to vector<8x256xbf16>
    %17 = vector.extract_strided_slice %15 {offsets = [0, 256], sizes = [8, 256], strides = [1, 1]} : vector<8x512xbf16> to vector<8x256xbf16>
    %c0_11 = arith.constant 0 : index
    %c0_12 = arith.constant 0 : index
    %18 = vector.load %arg6[%c0_11, %c0_12] : memref<256x256xbf16, #tpu.memory_space<vmem>>, vector<256x256xbf16>
    %cst_13 = arith.constant dense<0.000000e+00> : vector<8x256xf32>
    %19 = tpu.matmul %16, %18, %cst_13 {dimension_numbers = #tpu.dot_dimension_numbers<[1], [0], [0], [1], [0, 0, 1, 1], [], []>} : vector<8x256xbf16>, vector<256x256xbf16>, vector<8x256xf32> -> vector<8x256xf32>
    %c0_14 = arith.constant 0 : index
    %c0_15 = arith.constant 0 : index
    %20 = vector.load %arg8[%c0_14, %c0_15] : memref<256x256xbf16, #tpu.memory_space<vmem>>, vector<256x256xbf16>
    %cst_16 = arith.constant dense<0.000000e+00> : vector<8x256xf32>
    %21 = tpu.matmul %17, %20, %cst_16 {dimension_numbers = #tpu.dot_dimension_numbers<[1], [0], [0], [1], [0, 0, 1, 1], [], []>} : vector<8x256xbf16>, vector<256x256xbf16>, vector<8x256xf32> -> vector<8x256xf32>
    %22 = arith.truncf %19 : vector<8x256xf32> to vector<8x256xbf16>
    %c0_17 = arith.constant 0 : index
    %c0_18 = arith.constant 0 : index
    %23 = vector.load %arg7[%c0_17, %c0_18] : memref<1x256xf32, #tpu.memory_space<vmem>>, vector<1x256xf32>
    %24 = arith.truncf %23 : vector<1x256xf32> to vector<1x256xbf16>
    %25 = vector.broadcast %24 : vector<1x256xbf16> to vector<8x256xbf16>
    %26 = arith.addf %22, %25 : vector<8x256xbf16>
    %cst_19 = arith.constant 0.000000e+00 : bf16
    %27 = vector.broadcast %cst_19 : bf16 to vector<8x256xbf16>
    %28 = arith.maximumf %26, %27 : vector<8x256xbf16>
    %29 = arith.truncf %21 : vector<8x256xf32> to vector<8x256xbf16>
    %c0_20 = arith.constant 0 : index
    %c0_21 = arith.constant 0 : index
    %30 = vector.load %arg9[%c0_20, %c0_21] : memref<1x256xf32, #tpu.memory_space<vmem>>, vector<1x256xf32>
    %31 = arith.truncf %30 : vector<1x256xf32> to vector<1x256xbf16>
    %32 = vector.broadcast %31 : vector<1x256xbf16> to vector<8x256xbf16>
    %33 = arith.addf %29, %32 : vector<8x256xbf16>
    %cst_22 = arith.constant 0.000000e+00 : bf16
    %34 = vector.broadcast %cst_22 : bf16 to vector<8x256xbf16>
    %35 = arith.maximumf %33, %34 : vector<8x256xbf16>
    %36 = tpu.concatenate %28, %35 in 1 : vector<8x256xbf16>, vector<8x256xbf16> -> vector<8x512xbf16>
    %c0_23 = arith.constant 0 : index
    %c0_24 = arith.constant 0 : index
    %37 = vector.load %arg10[%c0_23, %c0_24] : memref<512x2xbf16, #tpu.memory_space<vmem>>, vector<512x2xbf16>
    %cst_25 = arith.constant dense<0.000000e+00> : vector<8x2xf32>
    %38 = tpu.matmul %36, %37, %cst_25 {dimension_numbers = #tpu.dot_dimension_numbers<[1], [0], [0], [1], [0, 0, 1, 1], [], []>} : vector<8x512xbf16>, vector<512x2xbf16>, vector<8x2xf32> -> vector<8x2xf32>
    %c0_26 = arith.constant 0 : index
    %c0_27 = arith.constant 0 : index
    %39 = vector.load %arg11[%c0_26, %c0_27] : memref<1x2xf32, #tpu.memory_space<vmem>>, vector<1x2xf32>
    %40 = vector.broadcast %39 : vector<1x2xf32> to vector<8x2xf32>
    %41 = arith.addf %38, %40 : vector<8x2xf32>
    %c0_28 = arith.constant 0 : index
    %c0_29 = arith.constant 0 : index
    %42 = vector.load %arg12[%c0_28, %c0_29] : memref<8x2xf32, #tpu.memory_space<vmem>>, vector<8x2xf32>
    tpu.vector_store %arg12[%c0_28, %c0_29], %41 {strides = array<i32>} : memref<8x2xf32, #tpu.memory_space<vmem>>, vector<8x2xf32>,
    return
  }
  func.func @transform_0(%arg0: i32) -> (i32, i32) {
    %c0_i32 = arith.constant 0 : i32
    %c0_i32_0 = arith.constant 0 : i32
    return %arg0, %c0_i32 : i32, i32
  }
  func.func @transform_1(%arg0: i32) -> (i32, i32) {
    %c0_i32 = arith.constant 0 : i32
    %c0_i32_0 = arith.constant 0 : i32
    return %arg0, %c0_i32 : i32, i32
  }
  func.func @transform_2(%arg0: i32) -> (i32, i32) {
    %c0_i32 = arith.constant 0 : i32
    %c0_i32_0 = arith.constant 0 : i32
    %c0_i32_1 = arith.constant 0 : i32
    return %c0_i32, %c0_i32_0 : i32, i32
  }
  func.func @transform_3(%arg0: i32) -> (i32, i32) {
    %c0_i32 = arith.constant 0 : i32
    %c0_i32_0 = arith.constant 0 : i32
    %c0_i32_1 = arith.constant 0 : i32
    return %c0_i32, %c0_i32_0 : i32, i32
  }
  func.func @transform_4(%arg0: i32) -> (i32, i32) {
    %c0_i32 = arith.constant 0 : i32
    %c0_i32_0 = arith.constant 0 : i32
    %c0_i32_1 = arith.constant 0 : i32
    return %c0_i32, %c0_i32_0 : i32, i32
  }
  func.func @transform_5(%arg0: i32) -> (i32, i32) {
    %c0_i32 = arith.constant 0 : i32
    %c0_i32_0 = arith.constant 0 : i32
    %c0_i32_1 = arith.constant 0 : i32
    return %c0_i32, %c0_i32_0 : i32, i32
  }
  func.func @transform_6(%arg0: i32) -> (i32, i32) {
    %c0_i32 = arith.constant 0 : i32
    %c0_i32_0 = arith.constant 0 : i32
    %c0_i32_1 = arith.constant 0 : i32
    return %c0_i32, %c0_i32_0 : i32, i32
  }
  func.func @transform_7(%arg0: i32) -> (i32, i32) {
    %c0_i32 = arith.constant 0 : i32
    %c0_i32_0 = arith.constant 0 : i32
    %c0_i32_1 = arith.constant 0 : i32
    return %c0_i32, %c0_i32_0 : i32, i32
  }
  func.func @transform_8(%arg0: i32) -> (i32, i32) {
    %c0_i32 = arith.constant 0 : i32
    %c0_i32_0 = arith.constant 0 : i32
    %c0_i32_1 = arith.constant 0 : i32
    return %c0_i32, %c0_i32_0 : i32, i32
  }
  func.func @transform_9(%arg0: i32) -> (i32, i32) {
    %c0_i32 = arith.constant 0 : i32
    %c0_i32_0 = arith.constant 0 : i32
    %c0_i32_1 = arith.constant 0 : i32
    return %c0_i32, %c0_i32_0 : i32, i32
  }
  func.func @transform_10(%arg0: i32) -> (i32, i32) {
    %c0_i32 = arith.constant 0 : i32
    %c0_i32_0 = arith.constant 0 : i32
    %c0_i32_1 = arith.constant 0 : i32
    return %c0_i32, %c0_i32_0 : i32, i32
  }
  func.func @transform_11(%arg0: i32) -> (i32, i32) {
    %c0_i32 = arith.constant 0 : i32
    %c0_i32_0 = arith.constant 0 : i32
    return %arg0, %c0_i32 : i32, i32
  }
}

</mosaic_0001>

<llo_original>
// kernel: _critic_forward_impl.1
$region0: #{_critic_forward_impl.1}
  #allocation0 [shape = 'u32[]', space=smem, size = 0x4, offset = 0x4, fixed_abs, tag = 'smem constant byte address 0x4 - core index']
  #allocation1 [shape = 'u32[144,128]{1,0:T(1,128)}', space=vmem, size = 0x12000, scoped, tag = 'internal scratch']
  %s0 = inlined_call_operand.hbm [shape: f32[8,24], index: 0, kind: input, shape index: {}]
  %s1 = inlined_call_operand.hbm [shape: f32[8,8], index: 1, kind: input, shape index: {}]
  %s2 = inlined_call_operand.hbm [shape: bf16[24,512], index: 2, kind: input, shape index: {}]
  %s3 = inlined_call_operand.vmem [shape: bf16[8,512], index: 3, kind: input, shape index: {}]
  %s4 = inlined_call_operand.vmem [shape: f32[1,512], index: 4, kind: input, shape index: {}]
  %s5 = inlined_call_operand.vmem [shape: bf16[256,256], index: 5, kind: input, shape index: {}]
  %s6 = inlined_call_operand.vmem [shape: f32[1,256], index: 6, kind: input, shape index: {}]
  %s7 = inlined_call_operand.hbm [shape: bf16[256,256], index: 7, kind: input, shape index: {}]
  %s8 = inlined_call_operand.vmem [shape: f32[1,256], index: 8, kind: input, shape index: {}]
  %s9 = inlined_call_operand.vmem [shape: bf16[512,2], index: 9, kind: input, shape index: {}]
  %s10 = inlined_call_operand.vmem [shape: f32[1,2], index: 10, kind: input, shape index: {}]
  %s11 = inlined_call_operand.vmem [shape: f32[8,2], index: 11, kind: output, shape index: {}]
  %s12 = sld [smem:[#allocation0]]
  $region70: #{_critic_forward_impl.1} parent=0
    _
  %s14 = ssub.s32 1, %s12
  %s15 = scalar_select 0, %s14, %s12
  $region1: #{_critic_forward_impl.1} parent=0
    #allocation2 [shape = 'u8[4096]{0}', space=vmem, size = 0x1000, scoped, tag = 'input window, operand 0, single buffered']
    #allocation3 [shape = 's32[1]{0}', space=sflag, size = 0x4, scoped, tag = 'scoped memory for _critic_forward_impl.1']
    #allocation4 [shape = 'u8[4096]{0}', space=vmem, size = 0x1000, scoped, tag = 'input window, operand 1, single buffered']
    #allocation5 [shape = 's32[1]{0}', space=sflag, size = 0x4, scoped, tag = 'scoped memory for _critic_forward_impl.1']
    #allocation6 [shape = 'u8[24576]{0}', space=vmem, size = 0x6000, scoped, tag = 'input window, operand 2, single buffered']
    #allocation7 [shape = 'u8[131072]{0}', space=vmem, size = 0x20000, scoped, tag = 'input window, operand 7, single buffered']
    #allocation8 [shape = 's32[1]{0}', space=sflag, size = 0x4, scoped, tag = 'scoped memory for _critic_forward_impl.1']
    %16 = vsyncpa [#allocation3], 0
    %17 = vsyncpa [#allocation5], 0
    %18 = vsyncpa [#allocation8], 0
    // Predicated region
    $region2: #{_critic_forward_impl.1} parent=1 // pred_check
      _
    $region3: #{_critic_forward_impl.1} parent=1 // pred_check_branch
      %20 = sbr.rel (0) target = $region5
    $region4: #{_critic_forward_impl.1} parent=1 // pred_region
      %s22 = ssub.s32 128, 128
      %23 = vsyncadd [#allocation3], %s22
      %s25 = sshll.u32 [#allocation2], 4
      %s26 = int_to_ptr.vmem [resolvable:$true] %s25
      %28 = dma.hbm_to_vmem [thread:$0]  %s0, 128, %s26, [#allocation3]
    $region5: #{_critic_forward_impl.1} parent=1 // pred_fallthru
      _
    // Predicated region
    $region6: #{_critic_forward_impl.1} parent=1 // pred_check
      _
    $region7: #{_critic_forward_impl.1} parent=1 // pred_check_branch
      %30 = sbr.rel (0) target = $region9
    $region8: #{_critic_forward_impl.1} parent=1 // pred_region
      %s32 = ssub.s32 128, 128
      %33 = vsyncadd [#allocation5], %s32
      %s35 = sshll.u32 [#allocation4], 4
      %s36 = int_to_ptr.vmem [resolvable:$true] %s35
      %38 = dma.hbm_to_vmem [thread:$0]  %s1, 128, %s36, [#allocation5]
    $region9: #{_critic_forward_impl.1} parent=1 // pred_fallthru
      _
    // Predicated region
    $region10: #{_critic_forward_impl.1} parent=1 // pred_check
      _
    $region11: #{_critic_forward_impl.1} parent=1 // pred_check_branch
      %40 = sbr.rel (0) target = $region13
    $region12: #{_critic_forward_impl.1} parent=1 // pred_region
      %s42 = ssub.s32 768, 768
      %43 = vsyncadd [#allocation5], %s42
      %s44 = sshll.u32 [#allocation6], 4
      %s45 = int_to_ptr.vmem [resolvable:$true] %s44
      %50 = dma.hbm_to_vmem [thread:$0]  %s2, 768, %s45, [#allocation5], 256, 256, 16
    $region13: #{_critic_forward_impl.1} parent=1 // pred_fallthru
      _
    // Predicated region
    $region14: #{_critic_forward_impl.1} parent=1 // pred_check
      _
    $region15: #{_critic_forward_impl.1} parent=1 // pred_check_branch
      %52 = sbr.rel (0) target = $region17
    $region16: #{_critic_forward_impl.1} parent=1 // pred_region
      _
    $region17: #{_critic_forward_impl.1} parent=1 // pred_fallthru
      _
    // Predicated region
    $region18: #{_critic_forward_impl.1} parent=1 // pred_check
      _
    $region19: #{_critic_forward_impl.1} parent=1 // pred_check_branch
      %54 = sbr.rel (0) target = $region21
    $region20: #{_critic_forward_impl.1} parent=1 // pred_region
      _
    $region21: #{_critic_forward_impl.1} parent=1 // pred_fallthru
      _
    // Predicated region
    $region22: #{_critic_forward_impl.1} parent=1 // pred_check
      _
    $region23: #{_critic_forward_impl.1} parent=1 // pred_check_branch
      %56 = sbr.rel (0) target = $region25
    $region24: #{_critic_forward_impl.1} parent=1 // pred_region
      _
    $region25: #{_critic_forward_impl.1} parent=1 // pred_fallthru
      _
    // Predicated region
    $region26: #{_critic_forward_impl.1} parent=1 // pred_check
      _
    $region27: #{_critic_forward_impl.1} parent=1 // pred_check_branch
      %58 = sbr.rel (0) target = $region29
    $region28: #{_critic_forward_impl.1} parent=1 // pred_region
      _
    $region29: #{_critic_forward_impl.1} parent=1 // pred_fallthru
      _
    // Predicated region
    $region30: #{_critic_forward_impl.1} parent=1 // pred_check
      _
    $region31: #{_critic_forward_impl.1} parent=1 // pred_check_branch
      %60 = sbr.rel (0) target = $region33
    $region32: #{_critic_forward_impl.1} parent=1 // pred_region
      %s62 = ssub.s32 4096, 4096
      %63 = vsyncadd [#allocation8], %s62
      %s64 = sshll.u32 [#allocation7], 4
      %s65 = int_to_ptr.vmem [resolvable:$true] %s64
      %70 = dma.hbm_to_vmem [thread:$0]  %s7, 4096, %s65, [#allocation8], 128, 128, 8
    $region33: #{_critic_forward_impl.1} parent=1 // pred_fallthru
      _
    // Predicated region
    $region34: #{_critic_forward_impl.1} parent=1 // pred_check
      _
    $region35: #{_critic_forward_impl.1} parent=1 // pred_check_branch
      %72 = sbr.rel (0) target = $region37
    $region36: #{_critic_forward_impl.1} parent=1 // pred_region
      _
    $region37: #{_critic_forward_impl.1} parent=1 // pred_fallthru
      _
    // Predicated region
    $region38: #{_critic_forward_impl.1} parent=1 // pred_check
      _
    $region39: #{_critic_forward_impl.1} parent=1 // pred_check_branch
      %74 = sbr.rel (0) target = $region41
    $region40: #{_critic_forward_impl.1} parent=1 // pred_region
      _
    $region41: #{_critic_forward_impl.1} parent=1 // pred_fallthru
      _
    // Predicated region
    $region42: #{_critic_forward_impl.1} parent=1 // pred_check
      _
    $region43: #{_critic_forward_impl.1} parent=1 // pred_check_branch
      %76 = sbr.rel (0) target = $region45
    $region44: #{_critic_forward_impl.1} parent=1 // pred_region
      _
    $region45: #{_critic_forward_impl.1} parent=1 // pred_fallthru
      _
    // Predicated region
    $region46: #{_critic_forward_impl.1} parent=1 // pred_check
      _
    $region47: #{_critic_forward_impl.1} parent=1 // pred_check_branch
      %78 = sbr.rel (0) target = $region49
    $region48: #{_critic_forward_impl.1} parent=1 // pred_region
      %79 = dma.done [#allocation3], 128
    $region49: #{_critic_forward_impl.1} parent=1 // pred_fallthru
      _
    // Predicated region
    $region50: #{_critic_forward_impl.1} parent=1 // pred_check
      _
    $region51: #{_critic_forward_impl.1} parent=1 // pred_check_branch
      %81 = sbr.rel (0) target = $region53
    $region52: #{_critic_forward_impl.1} parent=1 // pred_region
      %82 = dma.done [#allocation5], 128
    $region53: #{_critic_forward_impl.1} parent=1 // pred_fallthru
      _
    // Predicated region
    $region54: #{_critic_forward_impl.1} parent=1 // pred_check
      _
    $region55: #{_critic_forward_impl.1} parent=1 // pred_check_branch
      %84 = sbr.rel (0) target = $region57
    $region56: #{_critic_forward_impl.1} parent=1 // pred_region
      %85 = dma.done [#allocation5], 768
    $region57: #{_critic_forward_impl.1} parent=1 // pred_fallthru
      _
    // Predicated region
    $region58: #{_critic_forward_impl.1} parent=1 // pred_check
      _
    $region59: #{_critic_forward_impl.1} parent=1 // pred_check_branch
      %87 = sbr.rel (0) target = $region61
    $region60: #{_critic_forward_impl.1} parent=1 // pred_region
      %88 = dma.done [#allocation8], 4096
    $region61: #{_critic_forward_impl.1} parent=1 // pred_fallthru
      _
    %v90 = vld [vmem:[#allocation2] sm:$0xff]
    %v91 = vpack.c.bf16 %v90, %v90
    %v92 = vld [vmem:[#allocation4] sm:$0xff]
    %v93 = vpack.c.bf16 %v92, %v92
    %v94 = vld [vmem:[#allocation6] sm:$0xff]
    %v95 = vld [vmem:[#allocation6 + $0x8] sm:$0xff]
    %v96 = vld [vmem:[#allocation6 + $0x10] sm:$0xff]
    %v97 = vld [vmem:[#allocation6 + $0x18] sm:$0xff]
    %v98 = vld [vmem:[#allocation6 + $0x20] sm:$0xff]
    %v99 = vld [vmem:[#allocation6 + $0x28] sm:$0xff]
    %v100 = vld [vmem:[%s3] sm:$0xff]
    %v101 = vld [vmem:[%s3 + $0x8] sm:$0xff]
    %v104 = vunpack.c.l.b16 %v100
    %v105 = vunpack.c.h.b16 %v100
    %v106 = vunpack.c.l.b16 %v101
    %v107 = vunpack.c.h.b16 %v101
    %v108 = vpack.c.b16 %v104, %v104
    %v109 = vpack.c.b16 %v105, %v105
    %v110 = vpack.c.b16 %v106, %v106
    %v111 = vpack.c.b16 %v107, %v107
    %vm112 = vcmask 64512
    %v114 = vsel %vm112, %v93, 0
    %vm116 = vcmask 1043456
    %v118 = vsel %vm116, %v108, 0
    %v121 = vsel %vm116, %v109, 0
    %v124 = vsel %vm116, %v110, 0
    %v127 = vsel %vm116, %v111, 0
    %129 = vmatprep.subr.bf16.mxu0 %v121
    %130 = vmatpush1.bf16.msra.mxu0 %v118
    %131 = vmatprep.subr.bf16.mxu0 0
    %132 = vmatpush1.bf16.msra.mxu0 0
    %133 = vmatprep.subr.bf16.mxu0 0
    %134 = vmatpush1.bf16.msra.mxu0 0
    %135 = vmatprep.subr.bf16.mxu0 0
    %136 = vmatpush1.bf16.msra.mxu0 0
    %137 = vmatprep.subr.bf16.mxu0 0
    %138 = vmatpush1.bf16.msra.mxu0 0
    %139 = vmatprep.subr.bf16.mxu0 0
    %140 = vmatpush1.bf16.msra.mxu0 0
    %141 = vmatprep.subr.bf16.mxu0 0
    %142 = vmatpush1.bf16.msra.mxu0 0
    %143 = vmatprep.subr.bf16.mxu0 0
    %144 = vmatpush1.bf16.msra.mxu0 0
    %145 = vmatprep.subr.bf16.mxu0 0
    %146 = vmatpush1.bf16.msra.mxu0 0
    %147 = vmatprep.subr.bf16.mxu0 0
    %148 = vmatpush1.bf16.msra.mxu0 0
    %149 = vmatprep.subr.bf16.mxu0 0
    %150 = vmatpush1.bf16.msra.mxu0 0
    %151 = vmatprep.subr.bf16.mxu0 0
    %152 = vmatpush1.bf16.msra.mxu0 0
    %153 = vmatprep.subr.bf16.mxu0 0
    %154 = vmatpush1.bf16.msra.mxu0 0
    %155 = vmatprep.subr.bf16.mxu0 0
    %156 = vmatpush1.bf16.msra.mxu0 0
    %157 = vmatprep.subr.bf16.mxu0 0
    %158 = vmatpush1.bf16.msra.mxu0 0
    %159 = vmatprep.subr.bf16.mxu0 0
    %160 = vmatpush1.bf16.msra.mxu0 0
    %161 = vmatprep.mubr.bf16.mxu0 0
    %162 = vmatmul.mubr.bf16.gmra.mrb[0].mxu0 %v114
    %v163 = vpop.f32.mrb[0].mxu0
    %v164 = vadd.f32 0.0, %v163
    %v165 = vpop.f32.mrb[0].mxu0
    %v166 = vadd.f32 0.0, %v165
    %v167 = vpop.f32.mrb[0].mxu0
    %v168 = vpop.f32.mrb[0].mxu0
    %169 = vdwg.mxu0
    %170 = vmatprep.subr.bf16.mxu0 %v127
    %171 = vmatpush1.bf16.msra.mxu0 %v124
    %172 = vmatprep.subr.bf16.mxu0 0
    %173 = vmatpush1.bf16.msra.mxu0 0
    %174 = vmatprep.subr.bf16.mxu0 0
    %175 = vmatpush1.bf16.msra.mxu0 0
    %176 = vmatprep.subr.bf16.mxu0 0
    %177 = vmatpush1.bf16.msra.mxu0 0
    %178 = vmatprep.subr.bf16.mxu0 0
    %179 = vmatpush1.bf16.msra.mxu0 0
    %180 = vmatprep.subr.bf16.mxu0 0
    %181 = vmatpush1.bf16.msra.mxu0 0
    %182 = vmatprep.subr.bf16.mxu0 0
    %183 = vmatpush1.bf16.msra.mxu0 0
    %184 = vmatprep.subr.bf16.mxu0 0
    %185 = vmatpush1.bf16.msra.mxu0 0
    %186 = vmatprep.subr.bf16.mxu0 0
    %187 = vmatpush1.bf16.msra.mxu0 0
    %188 = vmatprep.subr.bf16.mxu0 0
    %189 = vmatpush1.bf16.msra.mxu0 0
    %190 = vmatprep.subr.bf16.mxu0 0
    %191 = vmatpush1.bf16.msra.mxu0 0
    %192 = vmatprep.subr.bf16.mxu0 0
    %193 = vmatpush1.bf16.msra.mxu0 0
    %194 = vmatprep.subr.bf16.mxu0 0
    %195 = vmatpush1.bf16.msra.mxu0 0
    %196 = vmatprep.subr.bf16.mxu0 0
    %197 = vmatpush1.bf16.msra.mxu0 0
    %198 = vmatprep.subr.bf16.mxu0 0
    %199 = vmatpush1.bf16.msra.mxu0 0
    %200 = vmatprep.subr.bf16.mxu0 0
    %201 = vmatpush1.bf16.msra.mxu0 0
    %202 = vmatprep.mubr.bf16.mxu0 0
    %203 = vmatmul.mubr.bf16.gmra.mrb[0].mxu0 %v114
    %v204 = vpop.f32.mrb[0].mxu0
    %v205 = vadd.f32 0.0, %v204
    %v206 = vpop.f32.mrb[0].mxu0
    %v207 = vadd.f32 0.0, %v206
    %v208 = vpop.f32.mrb[0].mxu0
    %v209 = vpop.f32.mrb[0].mxu0
    %210 = vdwg.mxu0
    %v217 = vunpack.c.l.b16 %v94
    %v218 = vunpack.c.h.b16 %v94
    %v219 = vunpack.c.l.b16 %v95
    %v220 = vunpack.c.h.b16 %v95
    %v221 = vunpack.c.l.b16 %v96
    %v222 = vunpack.c.h.b16 %v96
    %v223 = vunpack.c.l.b16 %v97
    %v224 = vunpack.c.h.b16 %v97
    %v225 = vunpack.c.l.b16 %v98
    %v226 = vunpack.c.h.b16 %v98
    %v227 = vunpack.c.l.b16 %v99
    %v228 = vunpack.c.h.b16 %v99
    %v229 = vpack.c.b16 %v221, %v217
    %v230 = vpack.c.b16 %v222, %v218
    %v231 = vpack.c.b16 %v223, %v219
    %v232 = vpack.c.b16 %v224, %v220
    %v233 = vpack.c.b16 %v225, %v225
    %v234 = vpack.c.b16 %v226, %v226
    %v235 = vpack.c.b16 %v227, %v227
    %v236 = vpack.c.b16 %v228, %v228
    %vm241 = vcmask 195584
    %v243 = vsel %vm241, %v91, 0
    %v246 = vsel %vm116, %v233, 0
    %v249 = vsel %vm116, %v234, 0
    %v252 = vsel %vm116, %v235, 0
    %v255 = vsel %vm116, %v236, 0
    %257 = vmatprep.subr.bf16.mxu0 %v230
    %258 = vmatpush1.bf16.msra.mxu0 %v229
    %259 = vmatprep.subr.bf16.mxu0 %v249
    %260 = vmatpush1.bf16.msra.mxu0 %v246
    %261 = vmatprep.subr.bf16.mxu0 0
    %262 = vmatpush1.bf16.msra.mxu0 0
    %263 = vmatprep.subr.bf16.mxu0 0
    %264 = vmatpush1.bf16.msra.mxu0 0
    %265 = vmatprep.subr.bf16.mxu0 0
    %266 = vmatpush1.bf16.msra.mxu0 0
    %267 = vmatprep.subr.bf16.mxu0 0
    %268 = vmatpush1.bf16.msra.mxu0 0
    %269 = vmatprep.subr.bf16.mxu0 0
    %270 = vmatpush1.bf16.msra.mxu0 0
    %271 = vmatprep.subr.bf16.mxu0 0
    %272 = vmatpush1.bf16.msra.mxu0 0
    %273 = vmatprep.subr.bf16.mxu0 0
    %274 = vmatpush1.bf16.msra.mxu0 0
    %275 = vmatprep.subr.bf16.mxu0 0
    %276 = vmatpush1.bf16.msra.mxu0 0
    %277 = vmatprep.subr.bf16.mxu0 0
    %278 = vmatpush1.bf16.msra.mxu0 0
    %279 = vmatprep.subr.bf16.mxu0 0
    %280 = vmatpush1.bf16.msra.mxu0 0
    %281 = vmatprep.subr.bf16.mxu0 0
    %282 = vmatpush1.bf16.msra.mxu0 0
    %283 = vmatprep.subr.bf16.mxu0 0
    %284 = vmatpush1.bf16.msra.mxu0 0
    %285 = vmatprep.subr.bf16.mxu0 0
    %286 = vmatpush1.bf16.msra.mxu0 0
    %287 = vmatprep.subr.bf16.mxu0 0
    %288 = vmatpush1.bf16.msra.mxu0 0
    %289 = vmatprep.mubr.bf16.mxu0 0
    %290 = vmatmul.mubr.bf16.gmra.mrb[0].mxu0 %v243
    %v291 = vpop.f32.mrb[0].mxu0
    %v292 = vadd.f32 %v164, %v291
    %v293 = vpop.f32.mrb[0].mxu0
    %v294 = vadd.f32 %v166, %v293
    %v295 = vpop.f32.mrb[0].mxu0
    %v296 = vpop.f32.mrb[0].mxu0
    %297 = vdwg.mxu0
    %298 = vmatprep.subr.bf16.mxu0 %v232
    %299 = vmatpush1.bf16.msra.mxu0 %v231
    %300 = vmatprep.subr.bf16.mxu0 %v255
    %301 = vmatpush1.bf16.msra.mxu0 %v252
    %302 = vmatprep.subr.bf16.mxu0 0
    %303 = vmatpush1.bf16.msra.mxu0 0
    %304 = vmatprep.subr.bf16.mxu0 0
    %305 = vmatpush1.bf16.msra.mxu0 0
    %306 = vmatprep.subr.bf16.mxu0 0
    %307 = vmatpush1.bf16.msra.mxu0 0
    %308 = vmatprep.subr.bf16.mxu0 0
    %309 = vmatpush1.bf16.msra.mxu0 0
    %310 = vmatprep.subr.bf16.mxu0 0
    %311 = vmatpush1.bf16.msra.mxu0 0
    %312 = vmatprep.subr.bf16.mxu0 0
    %313 = vmatpush1.bf16.msra.mxu0 0
    %314 = vmatprep.subr.bf16.mxu0 0
    %315 = vmatpush1.bf16.msra.mxu0 0
    %316 = vmatprep.subr.bf16.mxu0 0
    %317 = vmatpush1.bf16.msra.mxu0 0
    %318 = vmatprep.subr.bf16.mxu0 0
    %319 = vmatpush1.bf16.msra.mxu0 0
    %320 = vmatprep.subr.bf16.mxu0 0
    %321 = vmatpush1.bf16.msra.mxu0 0
    %322 = vmatprep.subr.bf16.mxu0 0
    %323 = vmatpush1.bf16.msra.mxu0 0
    %324 = vmatprep.subr.bf16.mxu0 0
    %325 = vmatpush1.bf16.msra.mxu0 0
    %326 = vmatprep.subr.bf16.mxu0 0
    %327 = vmatpush1.bf16.msra.mxu0 0
    %328 = vmatprep.subr.bf16.mxu0 0
    %329 = vmatpush1.bf16.msra.mxu0 0
    %330 = vmatprep.mubr.bf16.mxu0 0
    %331 = vmatmul.mubr.bf16.gmra.mrb[0].mxu0 %v243
    %v332 = vpop.f32.mrb[0].mxu0
    %v333 = vadd.f32 %v205, %v332
    %v334 = vpop.f32.mrb[0].mxu0
    %v335 = vadd.f32 %v207, %v334
    %v336 = vpop.f32.mrb[0].mxu0
    %v337 = vpop.f32.mrb[0].mxu0
    %338 = vdwg.mxu0
    %v339 = vpack.c.bf16 %v292, %v292
    %v340 = vpack.c.bf16 %v294, %v294
    %v341 = vpack.c.bf16 %v333, %v333
    %v342 = vpack.c.bf16 %v335, %v335
    %v343 = vld [vmem:[%s4] sm:$0xf]
    %v345 = vlaneseq
    %v346 = vshrl.u32 %v345, 7
    %v347 = vsub.s32 0, %v346
    %v348 = vrot.slane %v343, %v347
    %v349 = vlaneseq
    %v350 = vshrl.u32 %v349, 7
    %v351 = vsub.s32 1, %v350
    %v352 = vrot.slane %v343, %v351
    %v353 = vlaneseq
    %v354 = vshrl.u32 %v353, 7
    %v355 = vsub.s32 2, %v354
    %v356 = vrot.slane %v343, %v355
    %v357 = vlaneseq
    %v358 = vshrl.u32 %v357, 7
    %v359 = vsub.s32 3, %v358
    %v360 = vrot.slane %v343, %v359
    %v365 = vpack.c.bf16 %v348, %v348
    %v366 = vpack.c.bf16 %v352, %v352
    %v367 = vpack.c.bf16 %v356, %v356
    %v368 = vpack.c.bf16 %v360, %v360
    %v370 = vpack.i.b16 %v365, %v365
    %v372 = vlaneseq
    %v373 = vshrl.u32 %v372, 7
    %v374 = vsub.s32 0, %v373
    %v375 = vrot.slane %v370, %v374
    %v377 = vpack.i.b16 %v366, %v366
    %v379 = vlaneseq
    %v380 = vshrl.u32 %v379, 7
    %v381 = vsub.s32 0, %v380
    %v382 = vrot.slane %v377, %v381
    %v384 = vpack.i.b16 %v367, %v367
    %v386 = vlaneseq
    %v387 = vshrl.u32 %v386, 7
    %v388 = vsub.s32 0, %v387
    %v389 = vrot.slane %v384, %v388
    %v391 = vpack.i.b16 %v368, %v368
    %v393 = vlaneseq
    %v394 = vshrl.u32 %v393, 7
    %v395 = vsub.s32 0, %v394
    %v396 = vrot.slane %v391, %v395
    %v397 = vadd.bf16 %v339, %v375
    %v398 = vadd.bf16 %v340, %v382
    %v399 = vadd.bf16 %v341, %v389
    %v400 = vadd.bf16 %v342, %v396
    %v401 = vmax.bf16 %v397, 0
    %v402 = vmax.bf16 %v398, 0
    %v403 = vmax.bf16 %v399, 0
    %v404 = vmax.bf16 %v400, 0
    %v405 = vld [vmem:[%s5] sm:$0xff]
    %v406 = vld [vmem:[%s5 + $0x8] sm:$0xff]
    %v407 = vld [vmem:[%s5 + $0x10] sm:$0xff]
    %v408 = vld [vmem:[%s5 + $0x18] sm:$0xff]
    %v409 = vld [vmem:[%s5 + $0x20] sm:$0xff]
    %v410 = vld [vmem:[%s5 + $0x28] sm:$0xff]
    %v411 = vld [vmem:[%s5 + $0x30] sm:$0xff]
    %v412 = vld [vmem:[%s5 + $0x38] sm:$0xff]
    %v413 = vld [vmem:[%s5 + $0x40] sm:$0xff]
    %v414 = vld [vmem:[%s5 + $0x48] sm:$0xff]
    %v415 = vld [vmem:[%s5 + $0x50] sm:$0xff]
    %v416 = vld [vmem:[%s5 + $0x58] sm:$0xff]
    %v417 = vld [vmem:[%s5 + $0x60] sm:$0xff]
    %v418 = vld [vmem:[%s5 + $0x68] sm:$0xff]
    %v419 = vld [vmem:[%s5 + $0x70] sm:$0xff]
    %v420 = vld [vmem:[%s5 + $0x78] sm:$0xff]
    %v421 = vld [vmem:[%s5 + $0x80] sm:$0xff]
    %v422 = vld [vmem:[%s5 + $0x88] sm:$0xff]
    %v423 = vld [vmem:[%s5 + $0x90] sm:$0xff]
    %v424 = vld [vmem:[%s5 + $0x98] sm:$0xff]
    %v425 = vld [vmem:[%s5 + $0xa0] sm:$0xff]
    %v426 = vld [vmem:[%s5 + $0xa8] sm:$0xff]
    %v427 = vld [vmem:[%s5 + $0xb0] sm:$0xff]
    %v428 = vld [vmem:[%s5 + $0xb8] sm:$0xff]
    %v429 = vld [vmem:[%s5 + $0xc0] sm:$0xff]
    %v430 = vld [vmem:[%s5 + $0xc8] sm:$0xff]
    %v431 = vld [vmem:[%s5 + $0xd0] sm:$0xff]
    %v432 = vld [vmem:[%s5 + $0xd8] sm:$0xff]
    %v433 = vld [vmem:[%s5 + $0xe0] sm:$0xff]
    %v434 = vld [vmem:[%s5 + $0xe8] sm:$0xff]
    %v435 = vld [vmem:[%s5 + $0xf0] sm:$0xff]
    %v436 = vld [vmem:[%s5 + $0xf8] sm:$0xff]
    %v469 = vunpack.c.l.b16 %v405
    %v470 = vunpack.c.h.b16 %v405
    %v471 = vunpack.c.l.b16 %v406
    %v472 = vunpack.c.h.b16 %v406
    %v473 = vunpack.c.l.b16 %v407
    %v474 = vunpack.c.h.b16 %v407
    %v475 = vunpack.c.l.b16 %v408
    %v476 = vunpack.c.h.b16 %v408
    %v477 = vunpack.c.l.b16 %v409
    %v478 = vunpack.c.h.b16 %v409
    %v479 = vunpack.c.l.b16 %v410
    %v480 = vunpack.c.h.b16 %v410
    %v481 = vunpack.c.l.b16 %v411
    %v482 = vunpack.c.h.b16 %v411
    %v483 = vunpack.c.l.b16 %v412
    %v484 = vunpack.c.h.b16 %v412
    %v485 = vunpack.c.l.b16 %v413
    %v486 = vunpack.c.h.b16 %v413
    %v487 = vunpack.c.l.b16 %v414
    %v488 = vunpack.c.h.b16 %v414
    %v489 = vunpack.c.l.b16 %v415
    %v490 = vunpack.c.h.b16 %v415
    %v491 = vunpack.c.l.b16 %v416
    %v492 = vunpack.c.h.b16 %v416
    %v493 = vunpack.c.l.b16 %v417
    %v494 = vunpack.c.h.b16 %v417
    %v495 = vunpack.c.l.b16 %v418
    %v496 = vunpack.c.h.b16 %v418
    %v497 = vunpack.c.l.b16 %v419
    %v498 = vunpack.c.h.b16 %v419
    %v499 = vunpack.c.l.b16 %v420
    %v500 = vunpack.c.h.b16 %v420
    %v501 = vunpack.c.l.b16 %v421
    %v502 = vunpack.c.h.b16 %v421
    %v503 = vunpack.c.l.b16 %v422
    %v504 = vunpack.c.h.b16 %v422
    %v505 = vunpack.c.l.b16 %v423
    %v506 = vunpack.c.h.b16 %v423
    %v507 = vunpack.c.l.b16 %v424
    %v508 = vunpack.c.h.b16 %v424
    %v509 = vunpack.c.l.b16 %v425
    %v510 = vunpack.c.h.b16 %v425
    %v511 = vunpack.c.l.b16 %v426
    %v512 = vunpack.c.h.b16 %v426
    %v513 = vunpack.c.l.b16 %v427
    %v514 = vunpack.c.h.b16 %v427
    %v515 = vunpack.c.l.b16 %v428
    %v516 = vunpack.c.h.b16 %v428
    %v517 = vunpack.c.l.b16 %v429
    %v518 = vunpack.c.h.b16 %v429
    %v519 = vunpack.c.l.b16 %v430
    %v520 = vunpack.c.h.b16 %v430
    %v521 = vunpack.c.l.b16 %v431
    %v522 = vunpack.c.h.b16 %v431
    %v523 = vunpack.c.l.b16 %v432
    %v524 = vunpack.c.h.b16 %v432
    %v525 = vunpack.c.l.b16 %v433
    %v526 = vunpack.c.h.b16 %v433
    %v527 = vunpack.c.l.b16 %v434
    %v528 = vunpack.c.h.b16 %v434
    %v529 = vunpack.c.l.b16 %v435
    %v530 = vunpack.c.h.b16 %v435
    %v531 = vunpack.c.l.b16 %v436
    %v532 = vunpack.c.h.b16 %v436
    %v533 = vpack.c.b16 %v471, %v469
    %v534 = vpack.c.b16 %v472, %v470
    %v535 = vpack.c.b16 %v475, %v473
    %v536 = vpack.c.b16 %v476, %v474
    %v537 = vpack.c.b16 %v479, %v477
    %v538 = vpack.c.b16 %v480, %v478
    %v539 = vpack.c.b16 %v483, %v481
    %v540 = vpack.c.b16 %v484, %v482
    %v541 = vpack.c.b16 %v487, %v485
    %v542 = vpack.c.b16 %v488, %v486
    %v543 = vpack.c.b16 %v491, %v489
    %v544 = vpack.c.b16 %v492, %v490
    %v545 = vpack.c.b16 %v495, %v493
    %v546 = vpack.c.b16 %v496, %v494
    %v547 = vpack.c.b16 %v499, %v497
    %v548 = vpack.c.b16 %v500, %v498
    %v549 = vpack.c.b16 %v503, %v501
    %v550 = vpack.c.b16 %v504, %v502
    %v551 = vpack.c.b16 %v507, %v505
    %v552 = vpack.c.b16 %v508, %v506
    %v553 = vpack.c.b16 %v511, %v509
    %v554 = vpack.c.b16 %v512, %v510
    %v555 = vpack.c.b16 %v515, %v513
    %v556 = vpack.c.b16 %v516, %v514
    %v557 = vpack.c.b16 %v519, %v517
    %v558 = vpack.c.b16 %v520, %v518
    %v559 = vpack.c.b16 %v523, %v521
    %v560 = vpack.c.b16 %v524, %v522
    %v561 = vpack.c.b16 %v527, %v525
    %v562 = vpack.c.b16 %v528, %v526
    %v563 = vpack.c.b16 %v531, %v529
    %v564 = vpack.c.b16 %v532, %v530
    %597 = vmatprep.subr.bf16.mxu0 %v534
    %598 = vmatpush1.bf16.msra.mxu0 %v533
    %599 = vmatprep.subr.bf16.mxu0 %v536
    %600 = vmatpush1.bf16.msra.mxu0 %v535
    %601 = vmatprep.subr.bf16.mxu0 %v538
    %602 = vmatpush1.bf16.msra.mxu0 %v537
    %603 = vmatprep.subr.bf16.mxu0 %v540
    %604 = vmatpush1.bf16.msra.mxu0 %v539
    %605 = vmatprep.subr.bf16.mxu0 %v542
    %606 = vmatpush1.bf16.msra.mxu0 %v541
    %607 = vmatprep.subr.bf16.mxu0 %v544
    %608 = vmatpush1.bf16.msra.mxu0 %v543
    %609 = vmatprep.subr.bf16.mxu0 %v546
    %610 = vmatpush1.bf16.msra.mxu0 %v545
    %611 = vmatprep.subr.bf16.mxu0 %v548
    %612 = vmatpush1.bf16.msra.mxu0 %v547
    %613 = vmatprep.subr.bf16.mxu0 %v550
    %614 = vmatpush1.bf16.msra.mxu0 %v549
    %615 = vmatprep.subr.bf16.mxu0 %v552
    %616 = vmatpush1.bf16.msra.mxu0 %v551
    %617 = vmatprep.subr.bf16.mxu0 %v554
    %618 = vmatpush1.bf16.msra.mxu0 %v553
    %619 = vmatprep.subr.bf16.mxu0 %v556
    %620 = vmatpush1.bf16.msra.mxu0 %v555
    %621 = vmatprep.subr.bf16.mxu0 %v558
    %622 = vmatpush1.bf16.msra.mxu0 %v557
    %623 = vmatprep.subr.bf16.mxu0 %v560
    %624 = vmatpush1.bf16.msra.mxu0 %v559
    %625 = vmatprep.subr.bf16.mxu0 %v562
    %626 = vmatpush1.bf16.msra.mxu0 %v561
    %627 = vmatprep.subr.bf16.mxu0 %v564
    %628 = vmatpush1.bf16.msra.mxu0 %v563
    %629 = vmatprep.mubr.bf16.mxu0 %v402
    %630 = vmatmul.mubr.bf16.gmra.mrb[0].mxu0 %v401
    %v631 = vpop.f32.mrb[0].mxu0
    %v632 = vadd.f32 0.0, %v631
    %v633 = vpop.f32.mrb[0].mxu0
    %v634 = vadd.f32 0.0, %v633
    %v635 = vpop.f32.mrb[0].mxu0
    %v636 = vpop.f32.mrb[0].mxu0
    %637 = vdwg.mxu0
    %v638 = vld [vmem:[#allocation7] sm:$0xff]
    %v639 = vld [vmem:[#allocation7 + $0x8] sm:$0xff]
    %v640 = vld [vmem:[#allocation7 + $0x10] sm:$0xff]
    %v641 = vld [vmem:[#allocation7 + $0x18] sm:$0xff]
    %v642 = vld [vmem:[#allocation7 + $0x20] sm:$0xff]
    %v643 = vld [vmem:[#allocation7 + $0x28] sm:$0xff]
    %v644 = vld [vmem:[#allocation7 + $0x30] sm:$0xff]
    %v645 = vld [vmem:[#allocation7 + $0x38] sm:$0xff]
    %v646 = vld [vmem:[#allocation7 + $0x40] sm:$0xff]
    %v647 = vld [vmem:[#allocation7 + $0x48] sm:$0xff]
    %v648 = vld [vmem:[#allocation7 + $0x50] sm:$0xff]
    %v649 = vld [vmem:[#allocation7 + $0x58] sm:$0xff]
    %v650 = vld [vmem:[#allocation7 + $0x60] sm:$0xff]
    %v651 = vld [vmem:[#allocation7 + $0x68] sm:$0xff]
    %v652 = vld [vmem:[#allocation7 + $0x70] sm:$0xff]
    %v653 = vld [vmem:[#allocation7 + $0x78] sm:$0xff]
    %v654 = vld [vmem:[#allocation7 + $0x80] sm:$0xff]
    %v655 = vld [vmem:[#allocation7 + $0x88] sm:$0xff]
    %v656 = vld [vmem:[#allocation7 + $0x90] sm:$0xff]
    %v657 = vld [vmem:[#allocation7 + $0x98] sm:$0xff]
    %v658 = vld [vmem:[#allocation7 + $0xa0] sm:$0xff]
    %v659 = vld [vmem:[#allocation7 + $0xa8] sm:$0xff]
    %v660 = vld [vmem:[#allocation7 + $0xb0] sm:$0xff]
    %v661 = vld [vmem:[#allocation7 + $0xb8] sm:$0xff]
    %v662 = vld [vmem:[#allocation7 + $0xc0] sm:$0xff]
    %v663 = vld [vmem:[#allocation7 + $0xc8] sm:$0xff]
    %v664 = vld [vmem:[#allocation7 + $0xd0] sm:$0xff]
    %v665 = vld [vmem:[#allocation7 + $0xd8] sm:$0xff]
    %v666 = vld [vmem:[#allocation7 + $0xe0] sm:$0xff]
    %v667 = vld [vmem:[#allocation7 + $0xe8] sm:$0xff]
    %v668 = vld [vmem:[#allocation7 + $0xf0] sm:$0xff]
    %v669 = vld [vmem:[#allocation7 + $0xf8] sm:$0xff]
    %v702 = vunpack.c.l.b16 %v638
    %v703 = vunpack.c.h.b16 %v638
    %v704 = vunpack.c.l.b16 %v639
    %v705 = vunpack.c.h.b16 %v639
    %v706 = vunpack.c.l.b16 %v640
    %v707 = vunpack.c.h.b16 %v640
    %v708 = vunpack.c.l.b16 %v641
    %v709 = vunpack.c.h.b16 %v641
    %v710 = vunpack.c.l.b16 %v642
    %v711 = vunpack.c.h.b16 %v642
    %v712 = vunpack.c.l.b16 %v643
    %v713 = vunpack.c.h.b16 %v643
    %v714 = vunpack.c.l.b16 %v644
    %v715 = vunpack.c.h.b16 %v644
    %v716 = vunpack.c.l.b16 %v645
    %v717 = vunpack.c.h.b16 %v645
    %v718 = vunpack.c.l.b16 %v646
    %v719 = vunpack.c.h.b16 %v646
    %v720 = vunpack.c.l.b16 %v647
    %v721 = vunpack.c.h.b16 %v647
    %v722 = vunpack.c.l.b16 %v648
    %v723 = vunpack.c.h.b16 %v648
    %v724 = vunpack.c.l.b16 %v649
    %v725 = vunpack.c.h.b16 %v649
    %v726 = vunpack.c.l.b16 %v650
    %v727 = vunpack.c.h.b16 %v650
    %v728 = vunpack.c.l.b16 %v651
    %v729 = vunpack.c.h.b16 %v651
    %v730 = vunpack.c.l.b16 %v652
    %v731 = vunpack.c.h.b16 %v652
    %v732 = vunpack.c.l.b16 %v653
    %v733 = vunpack.c.h.b16 %v653
    %v734 = vunpack.c.l.b16 %v654
    %v735 = vunpack.c.h.b16 %v654
    %v736 = vunpack.c.l.b16 %v655
    %v737 = vunpack.c.h.b16 %v655
    %v738 = vunpack.c.l.b16 %v656
    %v739 = vunpack.c.h.b16 %v656
    %v740 = vunpack.c.l.b16 %v657
    %v741 = vunpack.c.h.b16 %v657
    %v742 = vunpack.c.l.b16 %v658
    %v743 = vunpack.c.h.b16 %v658
    %v744 = vunpack.c.l.b16 %v659
    %v745 = vunpack.c.h.b16 %v659
    %v746 = vunpack.c.l.b16 %v660
    %v747 = vunpack.c.h.b16 %v660
    %v748 = vunpack.c.l.b16 %v661
    %v749 = vunpack.c.h.b16 %v661
    %v750 = vunpack.c.l.b16 %v662
    %v751 = vunpack.c.h.b16 %v662
    %v752 = vunpack.c.l.b16 %v663
    %v753 = vunpack.c.h.b16 %v663
    %v754 = vunpack.c.l.b16 %v664
    %v755 = vunpack.c.h.b16 %v664
    %v756 = vunpack.c.l.b16 %v665
    %v757 = vunpack.c.h.b16 %v665
    %v758 = vunpack.c.l.b16 %v666
    %v759 = vunpack.c.h.b16 %v666
    %v760 = vunpack.c.l.b16 %v667
    %v761 = vunpack.c.h.b16 %v667
    %v762 = vunpack.c.l.b16 %v668
    %v763 = vunpack.c.h.b16 %v668
    %v764 = vunpack.c.l.b16 %v669
    %v765 = vunpack.c.h.b16 %v669
    %v766 = vpack.c.b16 %v704, %v702
    %v767 = vpack.c.b16 %v705, %v703
    %v768 = vpack.c.b16 %v708, %v706
    %v769 = vpack.c.b16 %v709, %v707
    %v770 = vpack.c.b16 %v712, %v710
    %v771 = vpack.c.b16 %v713, %v711
    %v772 = vpack.c.b16 %v716, %v714
    %v773 = vpack.c.b16 %v717, %v715
    %v774 = vpack.c.b16 %v720, %v718
    %v775 = vpack.c.b16 %v721, %v719
    %v776 = vpack.c.b16 %v724, %v722
    %v777 = vpack.c.b16 %v725, %v723
    %v778 = vpack.c.b16 %v728, %v726
    %v779 = vpack.c.b16 %v729, %v727
    %v780 = vpack.c.b16 %v732, %v730
    %v781 = vpack.c.b16 %v733, %v731
    %v782 = vpack.c.b16 %v736, %v734
    %v783 = vpack.c.b16 %v737, %v735
    %v784 = vpack.c.b16 %v740, %v738
    %v785 = vpack.c.b16 %v741, %v739
    %v786 = vpack.c.b16 %v744, %v742
    %v787 = vpack.c.b16 %v745, %v743
    %v788 = vpack.c.b16 %v748, %v746
    %v789 = vpack.c.b16 %v749, %v747
    %v790 = vpack.c.b16 %v752, %v750
    %v791 = vpack.c.b16 %v753, %v751
    %v792 = vpack.c.b16 %v756, %v754
    %v793 = vpack.c.b16 %v757, %v755
    %v794 = vpack.c.b16 %v760, %v758
    %v795 = vpack.c.b16 %v761, %v759
    %v796 = vpack.c.b16 %v764, %v762
    %v797 = vpack.c.b16 %v765, %v763
    %830 = vmatprep.subr.bf16.mxu0 %v767
    %831 = vmatpush1.bf16.msra.mxu0 %v766
    %832 = vmatprep.subr.bf16.mxu0 %v769
    %833 = vmatpush1.bf16.msra.mxu0 %v768
    %834 = vmatprep.subr.bf16.mxu0 %v771
    %835 = vmatpush1.bf16.msra.mxu0 %v770
    %836 = vmatprep.subr.bf16.mxu0 %v773
    %837 = vmatpush1.bf16.msra.mxu0 %v772
    %838 = vmatprep.subr.bf16.mxu0 %v775
    %839 = vmatpush1.bf16.msra.mxu0 %v774
    %840 = vmatprep.subr.bf16.mxu0 %v777
    %841 = vmatpush1.bf16.msra.mxu0 %v776
    %842 = vmatprep.subr.bf16.mxu0 %v779
    %843 = vmatpush1.bf16.msra.mxu0 %v778
    %844 = vmatprep.subr.bf16.mxu0 %v781
    %845 = vmatpush1.bf16.msra.mxu0 %v780
    %846 = vmatprep.subr.bf16.mxu0 %v783
    %847 = vmatpush1.bf16.msra.mxu0 %v782
    %848 = vmatprep.subr.bf16.mxu0 %v785
    %849 = vmatpush1.bf16.msra.mxu0 %v784
    %850 = vmatprep.subr.bf16.mxu0 %v787
    %851 = vmatpush1.bf16.msra.mxu0 %v786
    %852 = vmatprep.subr.bf16.mxu0 %v789
    %853 = vmatpush1.bf16.msra.mxu0 %v788
    %854 = vmatprep.subr.bf16.mxu0 %v791
    %855 = vmatpush1.bf16.msra.mxu0 %v790
    %856 = vmatprep.subr.bf16.mxu0 %v793
    %857 = vmatpush1.bf16.msra.mxu0 %v792
    %858 = vmatprep.subr.bf16.mxu0 %v795
    %859 = vmatpush1.bf16.msra.mxu0 %v794
    %860 = vmatprep.subr.bf16.mxu0 %v797
    %861 = vmatpush1.bf16.msra.mxu0 %v796
    %862 = vmatprep.mubr.bf16.mxu0 %v404
    %863 = vmatmul.mubr.bf16.gmra.mrb[0].mxu0 %v403
    %v864 = vpop.f32.mrb[0].mxu0
    %v865 = vadd.f32 0.0, %v864
    %v866 = vpop.f32.mrb[0].mxu0
    %v867 = vadd.f32 0.0, %v866
    %v868 = vpop.f32.mrb[0].mxu0
    %v869 = vpop.f32.mrb[0].mxu0
    %870 = vdwg.mxu0
    %v871 = vpack.c.bf16 %v632, %v632
    %v872 = vpack.c.bf16 %v634, %v634
    %v873 = vld [vmem:[%s6] sm:$0x3]
    %v875 = vlaneseq
    %v876 = vshrl.u32 %v875, 7
    %v877 = vsub.s32 0, %v876
    %v878 = vrot.slane %v873, %v877
    %v879 = vlaneseq
    %v880 = vshrl.u32 %v879, 7
    %v881 = vsub.s32 1, %v880
    %v882 = vrot.slane %v873, %v881
    %v885 = vpack.c.bf16 %v878, %v878
    %v886 = vpack.c.bf16 %v882, %v882
    %v888 = vpack.i.b16 %v885, %v885
    %v890 = vlaneseq
    %v891 = vshrl.u32 %v890, 7
    %v892 = vsub.s32 0, %v891
    %v893 = vrot.slane %v888, %v892
    %v895 = vpack.i.b16 %v886, %v886
    %v897 = vlaneseq
    %v898 = vshrl.u32 %v897, 7
    %v899 = vsub.s32 0, %v898
    %v900 = vrot.slane %v895, %v899
    %v901 = vadd.bf16 %v871, %v893
    %v902 = vadd.bf16 %v872, %v900
    %v903 = vmax.bf16 %v901, 0
    %v904 = vmax.bf16 %v902, 0
    %v905 = vpack.c.bf16 %v865, %v865
    %v906 = vpack.c.bf16 %v867, %v867
    %v907 = vld [vmem:[%s8] sm:$0x3]
    %v909 = vlaneseq
    %v910 = vshrl.u32 %v909, 7
    %v911 = vsub.s32 0, %v910
    %v912 = vrot.slane %v907, %v911
    %v913 = vlaneseq
    %v914 = vshrl.u32 %v913, 7
    %v915 = vsub.s32 1, %v914
    %v916 = vrot.slane %v907, %v915
    %v919 = vpack.c.bf16 %v912, %v912
    %v920 = vpack.c.bf16 %v916, %v916
    %v922 = vpack.i.b16 %v919, %v919
    %v924 = vlaneseq
    %v925 = vshrl.u32 %v924, 7
    %v926 = vsub.s32 0, %v925
    %v927 = vrot.slane %v922, %v926
    %v929 = vpack.i.b16 %v920, %v920
    %v931 = vlaneseq
    %v932 = vshrl.u32 %v931, 7
    %v933 = vsub.s32 0, %v932
    %v934 = vrot.slane %v929, %v933
    %v935 = vadd.bf16 %v905, %v927
    %v936 = vadd.bf16 %v906, %v934
    %v937 = vmax.bf16 %v935, 0
    %v938 = vmax.bf16 %v936, 0
    %v939 = vld [vmem:[%s9] sm:$0xf]
    %v940 = vld [vmem:[%s9 + $0x4] sm:$0xf]
    %v941 = vld [vmem:[%s9 + $0x8] sm:$0xf]
    %v942 = vld [vmem:[%s9 + $0xc] sm:$0xf]
    %v943 = vld [vmem:[%s9 + $0x10] sm:$0xf]
    %v944 = vld [vmem:[%s9 + $0x14] sm:$0xf]
    %v945 = vld [vmem:[%s9 + $0x18] sm:$0xf]
    %v946 = vld [vmem:[%s9 + $0x1c] sm:$0xf]
    %v947 = vld [vmem:[%s9 + $0x20] sm:$0xf]
    %v948 = vld [vmem:[%s9 + $0x24] sm:$0xf]
    %v949 = vld [vmem:[%s9 + $0x28] sm:$0xf]
    %v950 = vld [vmem:[%s9 + $0x2c] sm:$0xf]
    %v951 = vld [vmem:[%s9 + $0x30] sm:$0xf]
    %v952 = vld [vmem:[%s9 + $0x34] sm:$0xf]
    %v953 = vld [vmem:[%s9 + $0x38] sm:$0xf]
    %v954 = vld [vmem:[%s9 + $0x3c] sm:$0xf]
    %v955 = vld [vmem:[%s9 + $0x40] sm:$0xf]
    %v956 = vld [vmem:[%s9 + $0x44] sm:$0xf]
    %v957 = vld [vmem:[%s9 + $0x48] sm:$0xf]
    %v958 = vld [vmem:[%s9 + $0x4c] sm:$0xf]
    %v959 = vld [vmem:[%s9 + $0x50] sm:$0xf]
    %v960 = vld [vmem:[%s9 + $0x54] sm:$0xf]
    %v961 = vld [vmem:[%s9 + $0x58] sm:$0xf]
    %v962 = vld [vmem:[%s9 + $0x5c] sm:$0xf]
    %v963 = vld [vmem:[%s9 + $0x60] sm:$0xf]
    %v964 = vld [vmem:[%s9 + $0x64] sm:$0xf]
    %v965 = vld [vmem:[%s9 + $0x68] sm:$0xf]
    %v966 = vld [vmem:[%s9 + $0x6c] sm:$0xf]
    %v967 = vld [vmem:[%s9 + $0x70] sm:$0xf]
    %v968 = vld [vmem:[%s9 + $0x74] sm:$0xf]
    %v969 = vld [vmem:[%s9 + $0x78] sm:$0xf]
    %v970 = vld [vmem:[%s9 + $0x7c] sm:$0xf]
    %v971 = vld [vmem:[%s9 + $0x80] sm:$0xf]
    %v972 = vld [vmem:[%s9 + $0x84] sm:$0xf]
    %v973 = vld [vmem:[%s9 + $0x88] sm:$0xf]
    %v974 = vld [vmem:[%s9 + $0x8c] sm:$0xf]
    %v975 = vld [vmem:[%s9 + $0x90] sm:$0xf]
    %v976 = vld [vmem:[%s9 + $0x94] sm:$0xf]
    %v977 = vld [vmem:[%s9 + $0x98] sm:$0xf]
    %v978 = vld [vmem:[%s9 + $0x9c] sm:$0xf]
    %v979 = vld [vmem:[%s9 + $0xa0] sm:$0xf]
    %v980 = vld [vmem:[%s9 + $0xa4] sm:$0xf]
    %v981 = vld [vmem:[%s9 + $0xa8] sm:$0xf]
    %v982 = vld [vmem:[%s9 + $0xac] sm:$0xf]
    %v983 = vld [vmem:[%s9 + $0xb0] sm:$0xf]
    %v984 = vld [vmem:[%s9 + $0xb4] sm:$0xf]
    %v985 = vld [vmem:[%s9 + $0xb8] sm:$0xf]
    %v986 = vld [vmem:[%s9 + $0xbc] sm:$0xf]
    %v987 = vld [vmem:[%s9 + $0xc0] sm:$0xf]
    %v988 = vld [vmem:[%s9 + $0xc4] sm:$0xf]
    %v989 = vld [vmem:[%s9 + $0xc8] sm:$0xf]
    %v990 = vld [vmem:[%s9 + $0xcc] sm:$0xf]
    %v991 = vld [vmem:[%s9 + $0xd0] sm:$0xf]
    %v992 = vld [vmem:[%s9 + $0xd4] sm:$0xf]
    %v993 = vld [vmem:[%s9 + $0xd8] sm:$0xf]
    %v994 = vld [vmem:[%s9 + $0xdc] sm:$0xf]
    %v995 = vld [vmem:[%s9 + $0xe0] sm:$0xf]
    %v996 = vld [vmem:[%s9 + $0xe4] sm:$0xf]
    %v997 = vld [vmem:[%s9 + $0xe8] sm:$0xf]
    %v998 = vld [vmem:[%s9 + $0xec] sm:$0xf]
    %v999 = vld [vmem:[%s9 + $0xf0] sm:$0xf]
    %v1000 = vld [vmem:[%s9 + $0xf4] sm:$0xf]
    %v1001 = vld [vmem:[%s9 + $0xf8] sm:$0xf]
    %v1002 = vld [vmem:[%s9 + $0xfc] sm:$0xf]
    %v1003 = vld [vmem:[%s10] sm:$0x1]
    %v1005 = vlaneseq
    %v1006 = vshrl.u32 %v1005, 7
    %v1007 = vsub.s32 0, %v1006
    %v1008 = vrot.slane %v1003, %v1007
    %v1074 = vunpack.c.l.b16 %v939
    %v1075 = vunpack.c.l.b16 %v940
    %v1076 = vunpack.c.l.b16 %v941
    %v1077 = vunpack.c.l.b16 %v942
    %v1078 = vunpack.c.l.b16 %v943
    %v1079 = vunpack.c.l.b16 %v944
    %v1080 = vunpack.c.l.b16 %v945
    %v1081 = vunpack.c.l.b16 %v946
    %v1082 = vunpack.c.l.b16 %v947
    %v1083 = vunpack.c.l.b16 %v948
    %v1084 = vunpack.c.l.b16 %v949
    %v1085 = vunpack.c.l.b16 %v950
    %v1086 = vunpack.c.l.b16 %v951
    %v1087 = vunpack.c.l.b16 %v952
    %v1088 = vunpack.c.l.b16 %v953
    %v1089 = vunpack.c.l.b16 %v954
    %v1090 = vunpack.c.l.b16 %v955
    %v1091 = vunpack.c.l.b16 %v956
    %v1092 = vunpack.c.l.b16 %v957
    %v1093 = vunpack.c.l.b16 %v958
    %v1094 = vunpack.c.l.b16 %v959
    %v1095 = vunpack.c.l.b16 %v960
    %v1096 = vunpack.c.l.b16 %v961
    %v1097 = vunpack.c.l.b16 %v962
    %v1098 = vunpack.c.l.b16 %v963
    %v1099 = vunpack.c.l.b16 %v964
    %v1100 = vunpack.c.l.b16 %v965
    %v1101 = vunpack.c.l.b16 %v966
    %v1102 = vunpack.c.l.b16 %v967
    %v1103 = vunpack.c.l.b16 %v968
    %v1104 = vunpack.c.l.b16 %v969
    %v1105 = vunpack.c.l.b16 %v970
    %v1106 = vunpack.c.l.b16 %v971
    %v1107 = vunpack.c.l.b16 %v972
    %v1108 = vunpack.c.l.b16 %v973
    %v1109 = vunpack.c.l.b16 %v974
    %v1110 = vunpack.c.l.b16 %v975
    %v1111 = vunpack.c.l.b16 %v976
    %v1112 = vunpack.c.l.b16 %v977
    %v1113 = vunpack.c.l.b16 %v978
    %v1114 = vunpack.c.l.b16 %v979
    %v1115 = vunpack.c.l.b16 %v980
    %v1116 = vunpack.c.l.b16 %v981
    %v1117 = vunpack.c.l.b16 %v982
    %v1118 = vunpack.c.l.b16 %v983
    %v1119 = vunpack.c.l.b16 %v984
    %v1120 = vunpack.c.l.b16 %v985
    %v1121 = vunpack.c.l.b16 %v986
    %v1122 = vunpack.c.l.b16 %v987
    %v1123 = vunpack.c.l.b16 %v988
    %v1124 = vunpack.c.l.b16 %v989
    %v1125 = vunpack.c.l.b16 %v990
    %v1126 = vunpack.c.l.b16 %v991
    %v1127 = vunpack.c.l.b16 %v992
    %v1128 = vunpack.c.l.b16 %v993
    %v1129 = vunpack.c.l.b16 %v994
    %v1130 = vunpack.c.l.b16 %v995
    %v1131 = vunpack.c.l.b16 %v996
    %v1132 = vunpack.c.l.b16 %v997
    %v1133 = vunpack.c.l.b16 %v998
    %v1134 = vunpack.c.l.b16 %v999
    %v1135 = vunpack.c.l.b16 %v1000
    %v1136 = vunpack.c.l.b16 %v1001
    %v1137 = vunpack.c.l.b16 %v1002
    %v1138 = vpack.c.b16 %v1075, %v1074
    %v1139 = vpack.c.b16 %v1077, %v1076
    %v1140 = vpack.c.b16 %v1079, %v1078
    %v1141 = vpack.c.b16 %v1081, %v1080
    %v1142 = vpack.c.b16 %v1083, %v1082
    %v1143 = vpack.c.b16 %v1085, %v1084
    %v1144 = vpack.c.b16 %v1087, %v1086
    %v1145 = vpack.c.b16 %v1089, %v1088
    %v1146 = vpack.c.b16 %v1091, %v1090
    %v1147 = vpack.c.b16 %v1093, %v1092
    %v1148 = vpack.c.b16 %v1095, %v1094
    %v1149 = vpack.c.b16 %v1097, %v1096
    %v1150 = vpack.c.b16 %v1099, %v1098
    %v1151 = vpack.c.b16 %v1101, %v1100
    %v1152 = vpack.c.b16 %v1103, %v1102
    %v1153 = vpack.c.b16 %v1105, %v1104
    %v1154 = vpack.c.b16 %v1107, %v1106
    %v1155 = vpack.c.b16 %v1109, %v1108
    %v1156 = vpack.c.b16 %v1111, %v1110
    %v1157 = vpack.c.b16 %v1113, %v1112
    %v1158 = vpack.c.b16 %v1115, %v1114
    %v1159 = vpack.c.b16 %v1117, %v1116
    %v1160 = vpack.c.b16 %v1119, %v1118
    %v1161 = vpack.c.b16 %v1121, %v1120
    %v1162 = vpack.c.b16 %v1123, %v1122
    %v1163 = vpack.c.b16 %v1125, %v1124
    %v1164 = vpack.c.b16 %v1127, %v1126
    %v1165 = vpack.c.b16 %v1129, %v1128
    %v1166 = vpack.c.b16 %v1131, %v1130
    %v1167 = vpack.c.b16 %v1133, %v1132
    %v1168 = vpack.c.b16 %v1135, %v1134
    %v1169 = vpack.c.b16 %v1137, %v1136
    %1202 = vmatprep.subr.bf16.mxu0 0
    %1203 = vmatpush1.bf16.msra.mxu0 %v1138
    %1204 = vmatprep.subr.bf16.mxu0 0
    %1205 = vmatpush1.bf16.msra.mxu0 %v1139
    %1206 = vmatprep.subr.bf16.mxu0 0
    %1207 = vmatpush1.bf16.msra.mxu0 %v1140
    %1208 = vmatprep.subr.bf16.mxu0 0
    %1209 = vmatpush1.bf16.msra.mxu0 %v1141
    %1210 = vmatprep.subr.bf16.mxu0 0
    %1211 = vmatpush1.bf16.msra.mxu0 %v1142
    %1212 = vmatprep.subr.bf16.mxu0 0
    %1213 = vmatpush1.bf16.msra.mxu0 %v1143
    %1214 = vmatprep.subr.bf16.mxu0 0
    %1215 = vmatpush1.bf16.msra.mxu0 %v1144
    %1216 = vmatprep.subr.bf16.mxu0 0
    %1217 = vmatpush1.bf16.msra.mxu0 %v1145
    %1218 = vmatprep.subr.bf16.mxu0 0
    %1219 = vmatpush1.bf16.msra.mxu0 %v1146
    %1220 = vmatprep.subr.bf16.mxu0 0
    %1221 = vmatpush1.bf16.msra.mxu0 %v1147
    %1222 = vmatprep.subr.bf16.mxu0 0
    %1223 = vmatpush1.bf16.msra.mxu0 %v1148
    %1224 = vmatprep.subr.bf16.mxu0 0
    %1225 = vmatpush1.bf16.msra.mxu0 %v1149
    %1226 = vmatprep.subr.bf16.mxu0 0
    %1227 = vmatpush1.bf16.msra.mxu0 %v1150
    %1228 = vmatprep.subr.bf16.mxu0 0
    %1229 = vmatpush1.bf16.msra.mxu0 %v1151
    %1230 = vmatprep.subr.bf16.mxu0 0
    %1231 = vmatpush1.bf16.msra.mxu0 %v1152
    %1232 = vmatprep.subr.bf16.mxu0 0
    %1233 = vmatpush1.bf16.msra.mxu0 %v1153
    %1234 = vmatprep.mubr.bf16.mxu0 %v904
    %1235 = vmatmul.mubr.bf16.gmra.mrb[0].mxu0 %v903
    %v1236 = vpop.f32.mrb[0].mxu0
    %v1237 = vadd.f32 %v1008, %v1236
    %v1238 = vpop.f32.mrb[0].mxu0
    %v1239 = vpop.f32.mrb[0].mxu0
    %v1240 = vpop.f32.mrb[0].mxu0
    %1241 = vdwg.mxu0
    %1242 = vmatprep.subr.bf16.mxu0 0
    %1243 = vmatpush1.bf16.msra.mxu0 %v1154
    %1244 = vmatprep.subr.bf16.mxu0 0
    %1245 = vmatpush1.bf16.msra.mxu0 %v1155
    %1246 = vmatprep.subr.bf16.mxu0 0
    %1247 = vmatpush1.bf16.msra.mxu0 %v1156
    %1248 = vmatprep.subr.bf16.mxu0 0
    %1249 = vmatpush1.bf16.msra.mxu0 %v1157
    %1250 = vmatprep.subr.bf16.mxu0 0
    %1251 = vmatpush1.bf16.msra.mxu0 %v1158
    %1252 = vmatprep.subr.bf16.mxu0 0
    %1253 = vmatpush1.bf16.msra.mxu0 %v1159
    %1254 = vmatprep.subr.bf16.mxu0 0
    %1255 = vmatpush1.bf16.msra.mxu0 %v1160
    %1256 = vmatprep.subr.bf16.mxu0 0
    %1257 = vmatpush1.bf16.msra.mxu0 %v1161
    %1258 = vmatprep.subr.bf16.mxu0 0
    %1259 = vmatpush1.bf16.msra.mxu0 %v1162
    %1260 = vmatprep.subr.bf16.mxu0 0
    %1261 = vmatpush1.bf16.msra.mxu0 %v1163
    %1262 = vmatprep.subr.bf16.mxu0 0
    %1263 = vmatpush1.bf16.msra.mxu0 %v1164
    %1264 = vmatprep.subr.bf16.mxu0 0
    %1265 = vmatpush1.bf16.msra.mxu0 %v1165
    %1266 = vmatprep.subr.bf16.mxu0 0
    %1267 = vmatpush1.bf16.msra.mxu0 %v1166
    %1268 = vmatprep.subr.bf16.mxu0 0
    %1269 = vmatpush1.bf16.msra.mxu0 %v1167
    %1270 = vmatprep.subr.bf16.mxu0 0
    %1271 = vmatpush1.bf16.msra.mxu0 %v1168
    %1272 = vmatprep.subr.bf16.mxu0 0
    %1273 = vmatpush1.bf16.msra.mxu0 %v1169
    %1274 = vmatprep.mubr.bf16.mxu0 %v938
    %1275 = vmatmul.mubr.bf16.gmra.mrb[0].mxu0 %v937
    %v1276 = vpop.f32.mrb[0].mxu0
    %v1277 = vadd.f32 %v1237, %v1276
    %v1278 = vpop.f32.mrb[0].mxu0
    %v1279 = vpop.f32.mrb[0].mxu0
    %v1280 = vpop.f32.mrb[0].mxu0
    %1281 = vdwg.mxu0
    %vm1282 = vcmask 15360
    %1283 = vst.msk [vmem:[%s11] sm:$0xff] %vm1282, %v1277
    // Predicated region
    $region62: #{_critic_forward_impl.1} parent=1 // pred_check
      _
    $region63: #{_critic_forward_impl.1} parent=1 // pred_check_branch
      %1285 = sbr.rel (0) target = $region65
    $region64: #{_critic_forward_impl.1} parent=1 // pred_region
      _
    $region65: #{_critic_forward_impl.1} parent=1 // pred_fallthru
      _
    // Predicated region
    $region66: #{_critic_forward_impl.1} parent=1 // pred_check
      _
    $region67: #{_critic_forward_impl.1} parent=1 // pred_check_branch
      %1287 = sbr.rel (0) target = $region69
    $region68: #{_critic_forward_impl.1} parent=1 // pred_region
      _
    $region69: #{_critic_forward_impl.1} parent=1 // pred_fallthru
      _
    %1288 = vsyncpa [#allocation3], 1
    %1289 = vsyncpa [#allocation5], 1
    %1290 = vsyncpa [#allocation8], 1

// kernel: _critic_forward_impl.1
$region0: #{_critic_forward_impl.1}
  #allocation0 [shape = 'u32[]', space=smem, size = 0x4, offset = 0x4, fixed_abs, tag = 'smem constant byte address 0x4 - core index']
  #allocation1 [shape = 'u32[144,128]{1,0:T(1,128)}', space=vmem, size = 0x12000, scoped, tag = 'internal scratch']
  %s0 = inlined_call_operand.hbm [shape: f32[8,24], index: 0, kind: input, shape index: {}]
  %s1 = inlined_call_operand.hbm [shape: f32[8,8], index: 1, kind: input, shape index: {}]
  %s2 = inlined_call_operand.hbm [shape: bf16[24,512], index: 2, kind: input, shape index: {}]
  %s3 = inlined_call_operand.vmem [shape: bf16[8,512], index: 3, kind: input, shape index: {}]
  %s4 = inlined_call_operand.vmem [shape: f32[1,512], index: 4, kind: input, shape index: {}]
  %s5 = inlined_call_operand.vmem [shape: bf16[256,256], index: 5, kind: input, shape index: {}]
  %s6 = inlined_call_operand.vmem [shape: f32[1,256], index: 6, kind: input, shape index: {}]
  %s7 = inlined_call_operand.hbm [shape: bf16[256,256], index: 7, kind: input, shape index: {}]
  %s8 = inlined_call_operand.vmem [shape: f32[1,256], index: 8, kind: input, shape index: {}]
  %s9 = inlined_call_operand.vmem [shape: bf16[512,2], index: 9, kind: input, shape index: {}]
  %s10 = inlined_call_operand.vmem [shape: f32[1,2], index: 10, kind: input, shape index: {}]
  %s11 = inlined_call_operand.vmem [shape: f32[8,2], index: 11, kind: output, shape index: {}]
  %s12 = sld [smem:[#allocation0]]
  $region70: #{_critic_forward_impl.1} parent=0
    _
  %s14 = ssub.s32 1, %s12
  %s15 = scalar_select 0, %s14, %s12
  $region1: #{_critic_forward_impl.1} parent=0
    #allocation2 [shape = 'u8[4096]{0}', space=vmem, size = 0x1000, scoped, tag = 'input window, operand 0, single buffered']
    #allocation3 [shape = 's32[1]{0}', space=sflag, size = 0x4, scoped, tag = 'scoped memory for _critic_forward_impl.1']
    #allocation4 [shape = 'u8[4096]{0}', space=vmem, size = 0x1000, scoped, tag = 'input window, operand 1, single buffered']
    #allocation5 [shape = 's32[1]{0}', space=sflag, size = 0x4, scoped, tag = 'scoped memory for _critic_forward_impl.1']
    #allocation6 [shape = 'u8[24576]{0}', space=vmem, size = 0x6000, scoped, tag = 'input window, operand 2, single buffered']
    #allocation7 [shape = 'u8[131072]{0}', space=vmem, size = 0x20000, scoped, tag = 'input window, operand 7, single buffered']
    #allocation8 [shape = 's32[1]{0}', space=sflag, size = 0x4, scoped, tag = 'scoped memory for _critic_forward_impl.1']
    %16 = vsyncpa [#allocation3], 0
    %17 = vsyncpa [#allocation5], 0
    %18 = vsyncpa [#allocation8], 0
    // Predicated region
    $region2: #{_critic_forward_impl.1} parent=1 // pred_check
      _
    $region3: #{_critic_forward_impl.1} parent=1 // pred_check_branch
      %20 = sbr.rel (0) target = $region5
    $region4: #{_critic_forward_impl.1} parent=1 // pred_region
      %s22 = ssub.s32 128, 128
      %23 = vsyncadd [#allocation3], %s22
      %s25 = sshll.u32 [#allocation2], 4
      %s26 = int_to_ptr.vmem [resolvable:$true] %s25
      %28 = dma.hbm_to_vmem [thread:$0]  %s0, 128, %s26, [#allocation3]
    $region5: #{_critic_forward_impl.1} parent=1 // pred_fallthru
      _
    // Predicated region
    $region6: #{_critic_forward_impl.1} parent=1 // pred_check
      _
    $region7: #{_critic_forward_impl.1} parent=1 // pred_check_branch
      %30 = sbr.rel (0) target = $region9
    $region8: #{_critic_forward_impl.1} parent=1 // pred_region
      %s32 = ssub.s32 128, 128
      %33 = vsyncadd [#allocation5], %s32
      %s35 = sshll.u32 [#allocation4], 4
      %s36 = int_to_ptr.vmem [resolvable:$true] %s35
      %38 = dma.hbm_to_vmem [thread:$0]  %s1, 128, %s36, [#allocation5]
    $region9: #{_critic_forward_impl.1} parent=1 // pred_fallthru
      _
    // Predicated region
    $region10: #{_critic_forward_impl.1} parent=1 // pred_check
      _
    $region11: #{_critic_forward_impl.1} parent=1 // pred_check_branch
      %40 = sbr.rel (0) target = $region13
    $region12: #{_critic_forward_impl.1} parent=1 // pred_region
      %s42 = ssub.s32 768, 768
      %43 = vsyncadd [#allocation5], %s42
      %s44 = sshll.u32 [#allocation6], 4
      %s45 = int_to_ptr.vmem [resolvable:$true] %s44
      %50 = dma.hbm_to_vmem [thread:$0]  %s2, 768, %s45, [#allocation5], 256, 256, 16
    $region13: #{_critic_forward_impl.1} parent=1 // pred_fallthru
      _
    // Predicated region
    $region14: #{_critic_forward_impl.1} parent=1 // pred_check
      _
    $region15: #{_critic_forward_impl.1} parent=1 // pred_check_branch
      %52 = sbr.rel (0) target = $region17
    $region16: #{_critic_forward_impl.1} parent=1 // pred_region
      _
    $region17: #{_critic_forward_impl.1} parent=1 // pred_fallthru
      _
    // Predicated region
    $region18: #{_critic_forward_impl.1} parent=1 // pred_check
      _
    $region19: #{_critic_forward_impl.1} parent=1 // pred_check_branch
      %54 = sbr.rel (0) target = $region21
    $region20: #{_critic_forward_impl.1} parent=1 // pred_region
      _
    $region21: #{_critic_forward_impl.1} parent=1 // pred_fallthru
      _
    // Predicated region
    $region22: #{_critic_forward_impl.1} parent=1 // pred_check
      _
    $region23: #{_critic_forward_impl.1} parent=1 // pred_check_branch
      %56 = sbr.rel (0) target = $region25
    $region24: #{_critic_forward_impl.1} parent=1 // pred_region
      _
    $region25: #{_critic_forward_impl.1} parent=1 // pred_fallthru
      _
    // Predicated region
    $region26: #{_critic_forward_impl.1} parent=1 // pred_check
      _
    $region27: #{_critic_forward_impl.1} parent=1 // pred_check_branch
      %58 = sbr.rel (0) target = $region29
    $region28: #{_critic_forward_impl.1} parent=1 // pred_region
      _
    $region29: #{_critic_forward_impl.1} parent=1 // pred_fallthru
      _
    // Predicated region
    $region30: #{_critic_forward_impl.1} parent=1 // pred_check
      _
    $region31: #{_critic_forward_impl.1} parent=1 // pred_check_branch
      %60 = sbr.rel (0) target = $region33
    $region32: #{_critic_forward_impl.1} parent=1 // pred_region
      %s62 = ssub.s32 4096, 4096
      %63 = vsyncadd [#allocation8], %s62
      %s64 = sshll.u32 [#allocation7], 4
      %s65 = int_to_ptr.vmem [resolvable:$true] %s64
      %70 = dma.hbm_to_vmem [thread:$0]  %s7, 4096, %s65, [#allocation8], 128, 128, 8
    $region33: #{_critic_forward_impl.1} parent=1 // pred_fallthru
      _
    // Predicated region
    $region34: #{_critic_forward_impl.1} parent=1 // pred_check
      _
    $region35: #{_critic_forward_impl.1} parent=1 // pred_check_branch
      %72 = sbr.rel (0) target = $region37
    $region36: #{_critic_forward_impl.1} parent=1 // pred_region
      _
    $region37: #{_critic_forward_impl.1} parent=1 // pred_fallthru
      _
    // Predicated region
    $region38: #{_critic_forward_impl.1} parent=1 // pred_check
      _
    $region39: #{_critic_forward_impl.1} parent=1 // pred_check_branch
      %74 = sbr.rel (0) target = $region41
    $region40: #{_critic_forward_impl.1} parent=1 // pred_region
      _
    $region41: #{_critic_forward_impl.1} parent=1 // pred_fallthru
      _
    // Predicated region
    $region42: #{_critic_forward_impl.1} parent=1 // pred_check
      _
    $region43: #{_critic_forward_impl.1} parent=1 // pred_check_branch
      %76 = sbr.rel (0) target = $region45
    $region44: #{_critic_forward_impl.1} parent=1 // pred_region
      _
    $region45: #{_critic_forward_impl.1} parent=1 // pred_fallthru
      _
    // Predicated region
    $region46: #{_critic_forward_impl.1} parent=1 // pred_check
      _
    $region47: #{_critic_forward_impl.1} parent=1 // pred_check_branch
      %78 = sbr.rel (0) target = $region49
    $region48: #{_critic_forward_impl.1} parent=1 // pred_region
      %79 = dma.done [#allocation3], 128
    $region49: #{_critic_forward_impl.1} parent=1 // pred_fallthru
      _
    // Predicated region
    $region50: #{_critic_forward_impl.1} parent=1 // pred_check
      _
    $region51: #{_critic_forward_impl.1} parent=1 // pred_check_branch
      %81 = sbr.rel (0) target = $region53
    $region52: #{_critic_forward_impl.1} parent=1 // pred_region
      %82 = dma.done [#allocation5], 128
    $region53: #{_critic_forward_impl.1} parent=1 // pred_fallthru
      _
    // Predicated region
    $region54: #{_critic_forward_impl.1} parent=1 // pred_check
      _
    $region55: #{_critic_forward_impl.1} parent=1 // pred_check_branch
      %84 = sbr.rel (0) target = $region57
    $region56: #{_critic_forward_impl.1} parent=1 // pred_region
      %85 = dma.done [#allocation5], 768
    $region57: #{_critic_forward_impl.1} parent=1 // pred_fallthru
      _
    // Predicated region
    $region58: #{_critic_forward_impl.1} parent=1 // pred_check
      _
    $region59: #{_critic_forward_impl.1} parent=1 // pred_check_branch
      %87 = sbr.rel (0) target = $region61
    $region60: #{_critic_forward_impl.1} parent=1 // pred_region
      %88 = dma.done [#allocation8], 4096
    $region61: #{_critic_forward_impl.1} parent=1 // pred_fallthru
      _
    %v90 = vld [vmem:[#allocation2] sm:$0xff]
    %v91 = vpack.c.bf16 %v90, %v90
    %v92 = vld [vmem:[#allocation4] sm:$0xff]
    %v93 = vpack.c.bf16 %v92, %v92
    %v94 = vld [vmem:[#allocation6] sm:$0xff]
    %v95 = vld [vmem:[#allocation6 + $0x8] sm:$0xff]
    %v96 = vld [vmem:[#allocation6 + $0x10] sm:$0xff]
    %v97 = vld [vmem:[#allocation6 + $0x18] sm:$0xff]
    %v98 = vld [vmem:[#allocation6 + $0x20] sm:$0xff]
    %v99 = vld [vmem:[#allocation6 + $0x28] sm:$0xff]
    %v100 = vld [vmem:[%s3] sm:$0xff]
    %v101 = vld [vmem:[%s3 + $0x8] sm:$0xff]
    %v104 = vunpack.c.l.b16 %v100
    %v105 = vunpack.c.h.b16 %v100
    %v106 = vunpack.c.l.b16 %v101
    %v107 = vunpack.c.h.b16 %v101
    %v108 = vpack.c.b16 %v104, %v104
    %v109 = vpack.c.b16 %v105, %v105
    %v110 = vpack.c.b16 %v106, %v106
    %v111 = vpack.c.b16 %v107, %v107
    %vm112 = vcmask 64512
    %v114 = vsel %vm112, %v93, 0
    %vm116 = vcmask 1043456
    %v118 = vsel %vm116, %v108, 0
    %v121 = vsel %vm116, %v109, 0
    %v124 = vsel %vm116, %v110, 0
    %v127 = vsel %vm116, %v111, 0
    %129 = vmatprep.subr.bf16.mxu0 %v121
    %130 = vmatpush1.bf16.msra.mxu0 %v118
    %131 = vmatprep.subr.bf16.mxu0 0
    %132 = vmatpush1.bf16.msra.mxu0 0
    %133 = vmatprep.subr.bf16.mxu0 0
    %134 = vmatpush1.bf16.msra.mxu0 0
    %135 = vmatprep.subr.bf16.mxu0 0
    %136 = vmatpush1.bf16.msra.mxu0 0
    %137 = vmatprep.subr.bf16.mxu0 0
    %138 = vmatpush1.bf16.msra.mxu0 0
    %139 = vmatprep.subr.bf16.mxu0 0
    %140 = vmatpush1.bf16.msra.mxu0 0
    %141 = vmatprep.subr.bf16.mxu0 0
    %142 = vmatpush1.bf16.msra.mxu0 0
    %143 = vmatprep.subr.bf16.mxu0 0
    %144 = vmatpush1.bf16.msra.mxu0 0
    %145 = vmatprep.subr.bf16.mxu0 0
    %146 = vmatpush1.bf16.msra.mxu0 0
    %147 = vmatprep.subr.bf16.mxu0 0
    %148 = vmatpush1.bf16.msra.mxu0 0
    %149 = vmatprep.subr.bf16.mxu0 0
    %150 = vmatpush1.bf16.msra.mxu0 0
    %151 = vmatprep.subr.bf16.mxu0 0
    %152 = vmatpush1.bf16.msra.mxu0 0
    %153 = vmatprep.subr.bf16.mxu0 0
    %154 = vmatpush1.bf16.msra.mxu0 0
    %155 = vmatprep.subr.bf16.mxu0 0
    %156 = vmatpush1.bf16.msra.mxu0 0
    %157 = vmatprep.subr.bf16.mxu0 0
    %158 = vmatpush1.bf16.msra.mxu0 0
    %159 = vmatprep.subr.bf16.mxu0 0
    %160 = vmatpush1.bf16.msra.mxu0 0
    %161 = vmatprep.mubr.bf16.mxu0 0
    %162 = vmatmul.mubr.bf16.gmra.mrb[0].mxu0 %v114
    %v163 = vpop.f32.mrb[0].mxu0
    %v164 = vadd.f32 0.0, %v163
    %v165 = vpop.f32.mrb[0].mxu0
    %v166 = vadd.f32 0.0, %v165
    %v167 = vpop.f32.mrb[0].mxu0
    %v168 = vpop.f32.mrb[0].mxu0
    %169 = vdwg.mxu0
    %170 = vmatprep.subr.bf16.mxu0 %v127
    %171 = vmatpush1.bf16.msra.mxu0 %v124
    %172 = vmatprep.subr.bf16.mxu0 0
    %173 = vmatpush1.bf16.msra.mxu0 0
    %174 = vmatprep.subr.bf16.mxu0 0
    %175 = vmatpush1.bf16.msra.mxu0 0
    %176 = vmatprep.subr.bf16.mxu0 0
    %177 = vmatpush1.bf16.msra.mxu0 0
    %178 = vmatprep.subr.bf16.mxu0 0
    %179 = vmatpush1.bf16.msra.mxu0 0
    %180 = vmatprep.subr.bf16.mxu0 0
    %181 = vmatpush1.bf16.msra.mxu0 0
    %182 = vmatprep.subr.bf16.mxu0 0
    %183 = vmatpush1.bf16.msra.mxu0 0
    %184 = vmatprep.subr.bf16.mxu0 0
    %185 = vmatpush1.bf16.msra.mxu0 0
    %186 = vmatprep.subr.bf16.mxu0 0
    %187 = vmatpush1.bf16.msra.mxu0 0
    %188 = vmatprep.subr.bf16.mxu0 0
    %189 = vmatpush1.bf16.msra.mxu0 0
    %190 = vmatprep.subr.bf16.mxu0 0
    %191 = vmatpush1.bf16.msra.mxu0 0
    %192 = vmatprep.subr.bf16.mxu0 0
    %193 = vmatpush1.bf16.msra.mxu0 0
    %194 = vmatprep.subr.bf16.mxu0 0
    %195 = vmatpush1.bf16.msra.mxu0 0
    %196 = vmatprep.subr.bf16.mxu0 0
    %197 = vmatpush1.bf16.msra.mxu0 0
    %198 = vmatprep.subr.bf16.mxu0 0
    %199 = vmatpush1.bf16.msra.mxu0 0
    %200 = vmatprep.subr.bf16.mxu0 0
    %201 = vmatpush1.bf16.msra.mxu0 0
    %202 = vmatprep.mubr.bf16.mxu0 0
    %203 = vmatmul.mubr.bf16.gmra.mrb[0].mxu0 %v114
    %v204 = vpop.f32.mrb[0].mxu0
    %v205 = vadd.f32 0.0, %v204
    %v206 = vpop.f32.mrb[0].mxu0
    %v207 = vadd.f32 0.0, %v206
    %v208 = vpop.f32.mrb[0].mxu0
    %v209 = vpop.f32.mrb[0].mxu0
    %210 = vdwg.mxu0
    %v217 = vunpack.c.l.b16 %v94
    %v218 = vunpack.c.h.b16 %v94
    %v219 = vunpack.c.l.b16 %v95
    %v220 = vunpack.c.h.b16 %v95
    %v221 = vunpack.c.l.b16 %v96
    %v222 = vunpack.c.h.b16 %v96
    %v223 = vunpack.c.l.b16 %v97
    %v224 = vunpack.c.h.b16 %v97
    %v225 = vunpack.c.l.b16 %v98
    %v226 = vunpack.c.h.b16 %v98
    %v227 = vunpack.c.l.b16 %v99
    %v228 = vunpack.c.h.b16 %v99
    %v229 = vpack.c.b16 %v221, %v217
    %v230 = vpack.c.b16 %v222, %v218
    %v231 = vpack.c.b16 %v223, %v219
    %v232 = vpack.c.b16 %v224, %v220
    %v233 = vpack.c.b16 %v225, %v225
    %v234 = vpack.c.b16 %v226, %v226
    %v235 = vpack.c.b16 %v227, %v227
    %v236 = vpack.c.b16 %v228, %v228
    %vm241 = vcmask 195584
    %v243 = vsel %vm241, %v91, 0
    %v246 = vsel %vm116, %v233, 0
    %v249 = vsel %vm116, %v234, 0
    %v252 = vsel %vm116, %v235, 0
    %v255 = vsel %vm116, %v236, 0
    %257 = vmatprep.subr.bf16.mxu0 %v230
    %258 = vmatpush1.bf16.msra.mxu0 %v229
    %259 = vmatprep.subr.bf16.mxu0 %v249
    %260 = vmatpush1.bf16.msra.mxu0 %v246
    %261 = vmatprep.subr.bf16.mxu0 0
    %262 = vmatpush1.bf16.msra.mxu0 0
    %263 = vmatprep.subr.bf16.mxu0 0
    %264 = vmatpush1.bf16.msra.mxu0 0
    %265 = vmatprep.subr.bf16.mxu0 0
    %266 = vmatpush1.bf16.msra.mxu0 0
    %267 = vmatprep.subr.bf16.mxu0 0
    %268 = vmatpush1.bf16.msra.mxu0 0
    %269 = vmatprep.subr.bf16.mxu0 0
    %270 = vmatpush1.bf16.msra.mxu0 0
    %271 = vmatprep.subr.bf16.mxu0 0
    %272 = vmatpush1.bf16.msra.mxu0 0
    %273 = vmatprep.subr.bf16.mxu0 0
    %274 = vmatpush1.bf16.msra.mxu0 0
    %275 = vmatprep.subr.bf16.mxu0 0
    %276 = vmatpush1.bf16.msra.mxu0 0
    %277 = vmatprep.subr.bf16.mxu0 0
    %278 = vmatpush1.bf16.msra.mxu0 0
    %279 = vmatprep.subr.bf16.mxu0 0
    %280 = vmatpush1.bf16.msra.mxu0 0
    %281 = vmatprep.subr.bf16.mxu0 0
    %282 = vmatpush1.bf16.msra.mxu0 0
    %283 = vmatprep.subr.bf16.mxu0 0
    %284 = vmatpush1.bf16.msra.mxu0 0
    %285 = vmatprep.subr.bf16.mxu0 0
    %286 = vmatpush1.bf16.msra.mxu0 0
    %287 = vmatprep.subr.bf16.mxu0 0
    %288 = vmatpush1.bf16.msra.mxu0 0
    %289 = vmatprep.mubr.bf16.mxu0 0
    %290 = vmatmul.mubr.bf16.gmra.mrb[0].mxu0 %v243
    %v291 = vpop.f32.mrb[0].mxu0
    %v292 = vadd.f32 %v164, %v291
    %v293 = vpop.f32.mrb[0].mxu0
    %v294 = vadd.f32 %v166, %v293
    %v295 = vpop.f32.mrb[0].mxu0
    %v296 = vpop.f32.mrb[0].mxu0
    %297 = vdwg.mxu0
    %298 = vmatprep.subr.bf16.mxu0 %v232
    %299 = vmatpush1.bf16.msra.mxu0 %v231
    %300 = vmatprep.subr.bf16.mxu0 %v255
    %301 = vmatpush1.bf16.msra.mxu0 %v252
    %302 = vmatprep.subr.bf16.mxu0 0
    %303 = vmatpush1.bf16.msra.mxu0 0
    %304 = vmatprep.subr.bf16.mxu0 0
    %305 = vmatpush1.bf16.msra.mxu0 0
    %306 = vmatprep.subr.bf16.mxu0 0
    %307 = vmatpush1.bf16.msra.mxu0 0
    %308 = vmatprep.subr.bf16.mxu0 0
    %309 = vmatpush1.bf16.msra.mxu0 0
    %310 = vmatprep.subr.bf16.mxu0 0
    %311 = vmatpush1.bf16.msra.mxu0 0
    %312 = vmatprep.subr.bf16.mxu0 0
    %313 = vmatpush1.bf16.msra.mxu0 0
    %314 = vmatprep.subr.bf16.mxu0 0
    %315 = vmatpush1.bf16.msra.mxu0 0
    %316 = vmatprep.subr.bf16.mxu0 0
    %317 = vmatpush1.bf16.msra.mxu0 0
    %318 = vmatprep.subr.bf16.mxu0 0
    %319 = vmatpush1.bf16.msra.mxu0 0
    %320 = vmatprep.subr.bf16.mxu0 0
    %321 = vmatpush1.bf16.msra.mxu0 0
    %322 = vmatprep.subr.bf16.mxu0 0
    %323 = vmatpush1.bf16.msra.mxu0 0
    %324 = vmatprep.subr.bf16.mxu0 0
    %325 = vmatpush1.bf16.msra.mxu0 0
    %326 = vmatprep.subr.bf16.mxu0 0
    %327 = vmatpush1.bf16.msra.mxu0 0
    %328 = vmatprep.subr.bf16.mxu0 0
    %329 = vmatpush1.bf16.msra.mxu0 0
    %330 = vmatprep.mubr.bf16.mxu0 0
    %331 = vmatmul.mubr.bf16.gmra.mrb[0].mxu0 %v243
    %v332 = vpop.f32.mrb[0].mxu0
    %v333 = vadd.f32 %v205, %v332
    %v334 = vpop.f32.mrb[0].mxu0
    %v335 = vadd.f32 %v207, %v334
    %v336 = vpop.f32.mrb[0].mxu0
    %v337 = vpop.f32.mrb[0].mxu0
    %338 = vdwg.mxu0
    %v339 = vpack.c.bf16 %v292, %v292
    %v340 = vpack.c.bf16 %v294, %v294
    %v341 = vpack.c.bf16 %v333, %v333
    %v342 = vpack.c.bf16 %v335, %v335
    %v343 = vld [vmem:[%s4] sm:$0xf]
    %v345 = vlaneseq
    %v346 = vshrl.u32 %v345, 7
    %v347 = vsub.s32 0, %v346
    %v348 = vrot.slane %v343, %v347
    %v349 = vlaneseq
    %v350 = vshrl.u32 %v349, 7
    %v351 = vsub.s32 1, %v350
    %v352 = vrot.slane %v343, %v351
    %v353 = vlaneseq
    %v354 = vshrl.u32 %v353, 7
    %v355 = vsub.s32 2, %v354
    %v356 = vrot.slane %v343, %v355
    %v357 = vlaneseq
    %v358 = vshrl.u32 %v357, 7
    %v359 = vsub.s32 3, %v358
    %v360 = vrot.slane %v343, %v359
    %v365 = vpack.c.bf16 %v348, %v348
    %v366 = vpack.c.bf16 %v352, %v352
    %v367 = vpack.c.bf16 %v356, %v356
    %v368 = vpack.c.bf16 %v360, %v360
    %v370 = vpack.i.b16 %v365, %v365
    %v372 = vlaneseq
    %v373 = vshrl.u32 %v372, 7
    %v374 = vsub.s32 0, %v373
    %v375 = vrot.slane %v370, %v374
    %v377 = vpack.i.b16 %v366, %v366
    %v379 = vlaneseq
    %v380 = vshrl.u32 %v379, 7
    %v381 = vsub.s32 0, %v380
    %v382 = vrot.slane %v377, %v381
    %v384 = vpack.i.b16 %v367, %v367
    %v386 = vlaneseq
    %v387 = vshrl.u32 %v386, 7
    %v388 = vsub.s32 0, %v387
    %v389 = vrot.slane %v384, %v388
    %v391 = vpack.i.b16 %v368, %v368
    %v393 = vlaneseq
    %v394 = vshrl.u32 %v393, 7
    %v395 = vsub.s32 0, %v394
    %v396 = vrot.slane %v391, %v395
    %v397 = vadd.bf16 %v339, %v375
    %v398 = vadd.bf16 %v340, %v382
    %v399 = vadd.bf16 %v341, %v389
    %v400 = vadd.bf16 %v342, %v396
    %v401 = vmax.bf16 %v397, 0
    %v402 = vmax.bf16 %v398, 0
    %v403 = vmax.bf16 %v399, 0
    %v404 = vmax.bf16 %v400, 0
    %v405 = vld [vmem:[%s5] sm:$0xff]
    %v406 = vld [vmem:[%s5 + $0x8] sm:$0xff]
    %v407 = vld [vmem:[%s5 + $0x10] sm:$0xff]
    %v408 = vld [vmem:[%s5 + $0x18] sm:$0xff]
    %v409 = vld [vmem:[%s5 + $0x20] sm:$0xff]
    %v410 = vld [vmem:[%s5 + $0x28] sm:$0xff]
    %v411 = vld [vmem:[%s5 + $0x30] sm:$0xff]
    %v412 = vld [vmem:[%s5 + $0x38] sm:$0xff]
    %v413 = vld [vmem:[%s5 + $0x40] sm:$0xff]
    %v414 = vld [vmem:[%s5 + $0x48] sm:$0xff]
    %v415 = vld [vmem:[%s5 + $0x50] sm:$0xff]
    %v416 = vld [vmem:[%s5 + $0x58] sm:$0xff]
    %v417 = vld [vmem:[%s5 + $0x60] sm:$0xff]
    %v418 = vld [vmem:[%s5 + $0x68] sm:$0xff]
    %v419 = vld [vmem:[%s5 + $0x70] sm:$0xff]
    %v420 = vld [vmem:[%s5 + $0x78] sm:$0xff]
    %v421 = vld [vmem:[%s5 + $0x80] sm:$0xff]
    %v422 = vld [vmem:[%s5 + $0x88] sm:$0xff]
    %v423 = vld [vmem:[%s5 + $0x90] sm:$0xff]
    %v424 = vld [vmem:[%s5 + $0x98] sm:$0xff]
    %v425 = vld [vmem:[%s5 + $0xa0] sm:$0xff]
    %v426 = vld [vmem:[%s5 + $0xa8] sm:$0xff]
    %v427 = vld [vmem:[%s5 + $0xb0] sm:$0xff]
    %v428 = vld [vmem:[%s5 + $0xb8] sm:$0xff]
    %v429 = vld [vmem:[%s5 + $0xc0] sm:$0xff]
    %v430 = vld [vmem:[%s5 + $0xc8] sm:$0xff]
    %v431 = vld [vmem:[%s5 + $0xd0] sm:$0xff]
    %v432 = vld [vmem:[%s5 + $0xd8] sm:$0xff]
    %v433 = vld [vmem:[%s5 + $0xe0] sm:$0xff]
    %v434 = vld [vmem:[%s5 + $0xe8] sm:$0xff]
    %v435 = vld [vmem:[%s5 + $0xf0] sm:$0xff]
    %v436 = vld [vmem:[%s5 + $0xf8] sm:$0xff]
    %v469 = vunpack.c.l.b16 %v405
    %v470 = vunpack.c.h.b16 %v405
    %v471 = vunpack.c.l.b16 %v406
    %v472 = vunpack.c.h.b16 %v406
    %v473 = vunpack.c.l.b16 %v407
    %v474 = vunpack.c.h.b16 %v407
    %v475 = vunpack.c.l.b16 %v408
    %v476 = vunpack.c.h.b16 %v408
    %v477 = vunpack.c.l.b16 %v409
    %v478 = vunpack.c.h.b16 %v409
    %v479 = vunpack.c.l.b16 %v410
    %v480 = vunpack.c.h.b16 %v410
    %v481 = vunpack.c.l.b16 %v411
    %v482 = vunpack.c.h.b16 %v411
    %v483 = vunpack.c.l.b16 %v412
    %v484 = vunpack.c.h.b16 %v412
    %v485 = vunpack.c.l.b16 %v413
    %v486 = vunpack.c.h.b16 %v413
    %v487 = vunpack.c.l.b16 %v414
    %v488 = vunpack.c.h.b16 %v414
    %v489 = vunpack.c.l.b16 %v415
    %v490 = vunpack.c.h.b16 %v415
    %v491 = vunpack.c.l.b16 %v416
    %v492 = vunpack.c.h.b16 %v416
    %v493 = vunpack.c.l.b16 %v417
    %v494 = vunpack.c.h.b16 %v417
    %v495 = vunpack.c.l.b16 %v418
    %v496 = vunpack.c.h.b16 %v418
    %v497 = vunpack.c.l.b16 %v419
    %v498 = vunpack.c.h.b16 %v419
    %v499 = vunpack.c.l.b16 %v420
    %v500 = vunpack.c.h.b16 %v420
    %v501 = vunpack.c.l.b16 %v421
    %v502 = vunpack.c.h.b16 %v421
    %v503 = vunpack.c.l.b16 %v422
    %v504 = vunpack.c.h.b16 %v422
    %v505 = vunpack.c.l.b16 %v423
    %v506 = vunpack.c.h.b16 %v423
    %v507 = vunpack.c.l.b16 %v424
    %v508 = vunpack.c.h.b16 %v424
    %v509 = vunpack.c.l.b16 %v425
    %v510 = vunpack.c.h.b16 %v425
    %v511 = vunpack.c.l.b16 %v426
    %v512 = vunpack.c.h.b16 %v426
    %v513 = vunpack.c.l.b16 %v427
    %v514 = vunpack.c.h.b16 %v427
    %v515 = vunpack.c.l.b16 %v428
    %v516 = vunpack.c.h.b16 %v428
    %v517 = vunpack.c.l.b16 %v429
    %v518 = vunpack.c.h.b16 %v429
    %v519 = vunpack.c.l.b16 %v430
    %v520 = vunpack.c.h.b16 %v430
    %v521 = vunpack.c.l.b16 %v431
    %v522 = vunpack.c.h.b16 %v431
    %v523 = vunpack.c.l.b16 %v432
    %v524 = vunpack.c.h.b16 %v432
    %v525 = vunpack.c.l.b16 %v433
    %v526 = vunpack.c.h.b16 %v433
    %v527 = vunpack.c.l.b16 %v434
    %v528 = vunpack.c.h.b16 %v434
    %v529 = vunpack.c.l.b16 %v435
    %v530 = vunpack.c.h.b16 %v435
    %v531 = vunpack.c.l.b16 %v436
    %v532 = vunpack.c.h.b16 %v436
    %v533 = vpack.c.b16 %v471, %v469
    %v534 = vpack.c.b16 %v472, %v470
    %v535 = vpack.c.b16 %v475, %v473
    %v536 = vpack.c.b16 %v476, %v474
    %v537 = vpack.c.b16 %v479, %v477
    %v538 = vpack.c.b16 %v480, %v478
    %v539 = vpack.c.b16 %v483, %v481
    %v540 = vpack.c.b16 %v484, %v482
    %v541 = vpack.c.b16 %v487, %v485
    %v542 = vpack.c.b16 %v488, %v486
    %v543 = vpack.c.b16 %v491, %v489
    %v544 = vpack.c.b16 %v492, %v490
    %v545 = vpack.c.b16 %v495, %v493
    %v546 = vpack.c.b16 %v496, %v494
    %v547 = vpack.c.b16 %v499, %v497
    %v548 = vpack.c.b16 %v500, %v498
    %v549 = vpack.c.b16 %v503, %v501
    %v550 = vpack.c.b16 %v504, %v502
    %v551 = vpack.c.b16 %v507, %v505
    %v552 = vpack.c.b16 %v508, %v506
    %v553 = vpack.c.b16 %v511, %v509
    %v554 = vpack.c.b16 %v512, %v510
    %v555 = vpack.c.b16 %v515, %v513
    %v556 = vpack.c.b16 %v516, %v514
    %v557 = vpack.c.b16 %v519, %v517
    %v558 = vpack.c.b16 %v520, %v518
    %v559 = vpack.c.b16 %v523, %v521
    %v560 = vpack.c.b16 %v524, %v522
    %v561 = vpack.c.b16 %v527, %v525
    %v562 = vpack.c.b16 %v528, %v526
    %v563 = vpack.c.b16 %v531, %v529
    %v564 = vpack.c.b16 %v532, %v530
    %597 = vmatprep.subr.bf16.mxu0 %v534
    %598 = vmatpush1.bf16.msra.mxu0 %v533
    %599 = vmatprep.subr.bf16.mxu0 %v536
    %600 = vmatpush1.bf16.msra.mxu0 %v535
    %601 = vmatprep.subr.bf16.mxu0 %v538
    %602 = vmatpush1.bf16.msra.mxu0 %v537
    %603 = vmatprep.subr.bf16.mxu0 %v540
    %604 = vmatpush1.bf16.msra.mxu0 %v539
    %605 = vmatprep.subr.bf16.mxu0 %v542
    %606 = vmatpush1.bf16.msra.mxu0 %v541
    %607 = vmatprep.subr.bf16.mxu0 %v544
    %608 = vmatpush1.bf16.msra.mxu0 %v543
    %609 = vmatprep.subr.bf16.mxu0 %v546
    %610 = vmatpush1.bf16.msra.mxu0 %v545
    %611 = vmatprep.subr.bf16.mxu0 %v548
    %612 = vmatpush1.bf16.msra.mxu0 %v547
    %613 = vmatprep.subr.bf16.mxu0 %v550
    %614 = vmatpush1.bf16.msra.mxu0 %v549
    %615 = vmatprep.subr.bf16.mxu0 %v552
    %616 = vmatpush1.bf16.msra.mxu0 %v551
    %617 = vmatprep.subr.bf16.mxu0 %v554
    %618 = vmatpush1.bf16.msra.mxu0 %v553
    %619 = vmatprep.subr.bf16.mxu0 %v556
    %620 = vmatpush1.bf16.msra.mxu0 %v555
    %621 = vmatprep.subr.bf16.mxu0 %v558
    %622 = vmatpush1.bf16.msra.mxu0 %v557
    %623 = vmatprep.subr.bf16.mxu0 %v560
    %624 = vmatpush1.bf16.msra.mxu0 %v559
    %625 = vmatprep.subr.bf16.mxu0 %v562
    %626 = vmatpush1.bf16.msra.mxu0 %v561
    %627 = vmatprep.subr.bf16.mxu0 %v564
    %628 = vmatpush1.bf16.msra.mxu0 %v563
    %629 = vmatprep.mubr.bf16.mxu0 %v402
    %630 = vmatmul.mubr.bf16.gmra.mrb[0].mxu0 %v401
    %v631 = vpop.f32.mrb[0].mxu0
    %v632 = vadd.f32 0.0, %v631
    %v633 = vpop.f32.mrb[0].mxu0
    %v634 = vadd.f32 0.0, %v633
    %v635 = vpop.f32.mrb[0].mxu0
    %v636 = vpop.f32.mrb[0].mxu0
    %637 = vdwg.mxu0
    %v638 = vld [vmem:[#allocation7] sm:$0xff]
    %v639 = vld [vmem:[#allocation7 + $0x8] sm:$0xff]
    %v640 = vld [vmem:[#allocation7 + $0x10] sm:$0xff]
    %v641 = vld [vmem:[#allocation7 + $0x18] sm:$0xff]
    %v642 = vld [vmem:[#allocation7 + $0x20] sm:$0xff]
    %v643 = vld [vmem:[#allocation7 + $0x28] sm:$0xff]
    %v644 = vld [vmem:[#allocation7 + $0x30] sm:$0xff]
    %v645 = vld [vmem:[#allocation7 + $0x38] sm:$0xff]
    %v646 = vld [vmem:[#allocation7 + $0x40] sm:$0xff]
    %v647 = vld [vmem:[#allocation7 + $0x48] sm:$0xff]
    %v648 = vld [vmem:[#allocation7 + $0x50] sm:$0xff]
    %v649 = vld [vmem:[#allocation7 + $0x58] sm:$0xff]
    %v650 = vld [vmem:[#allocation7 + $0x60] sm:$0xff]
    %v651 = vld [vmem:[#allocation7 + $0x68] sm:$0xff]
    %v652 = vld [vmem:[#allocation7 + $0x70] sm:$0xff]
    %v653 = vld [vmem:[#allocation7 + $0x78] sm:$0xff]
    %v654 = vld [vmem:[#allocation7 + $0x80] sm:$0xff]
    %v655 = vld [vmem:[#allocation7 + $0x88] sm:$0xff]
    %v656 = vld [vmem:[#allocation7 + $0x90] sm:$0xff]
    %v657 = vld [vmem:[#allocation7 + $0x98] sm:$0xff]
    %v658 = vld [vmem:[#allocation7 + $0xa0] sm:$0xff]
    %v659 = vld [vmem:[#allocation7 + $0xa8] sm:$0xff]
    %v660 = vld [vmem:[#allocation7 + $0xb0] sm:$0xff]
    %v661 = vld [vmem:[#allocation7 + $0xb8] sm:$0xff]
    %v662 = vld [vmem:[#allocation7 + $0xc0] sm:$0xff]
    %v663 = vld [vmem:[#allocation7 + $0xc8] sm:$0xff]
    %v664 = vld [vmem:[#allocation7 + $0xd0] sm:$0xff]
    %v665 = vld [vmem:[#allocation7 + $0xd8] sm:$0xff]
    %v666 = vld [vmem:[#allocation7 + $0xe0] sm:$0xff]
    %v667 = vld [vmem:[#allocation7 + $0xe8] sm:$0xff]
    %v668 = vld [vmem:[#allocation7 + $0xf0] sm:$0xff]
    %v669 = vld [vmem:[#allocation7 + $0xf8] sm:$0xff]
    %v702 = vunpack.c.l.b16 %v638
    %v703 = vunpack.c.h.b16 %v638
    %v704 = vunpack.c.l.b16 %v639
    %v705 = vunpack.c.h.b16 %v639
    %v706 = vunpack.c.l.b16 %v640
    %v707 = vunpack.c.h.b16 %v640
    %v708 = vunpack.c.l.b16 %v641
    %v709 = vunpack.c.h.b16 %v641
    %v710 = vunpack.c.l.b16 %v642
    %v711 = vunpack.c.h.b16 %v642
    %v712 = vunpack.c.l.b16 %v643
    %v713 = vunpack.c.h.b16 %v643
    %v714 = vunpack.c.l.b16 %v644
    %v715 = vunpack.c.h.b16 %v644
    %v716 = vunpack.c.l.b16 %v645
    %v717 = vunpack.c.h.b16 %v645
    %v718 = vunpack.c.l.b16 %v646
    %v719 = vunpack.c.h.b16 %v646
    %v720 = vunpack.c.l.b16 %v647
    %v721 = vunpack.c.h.b16 %v647
    %v722 = vunpack.c.l.b16 %v648
    %v723 = vunpack.c.h.b16 %v648
    %v724 = vunpack.c.l.b16 %v649
    %v725 = vunpack.c.h.b16 %v649
    %v726 = vunpack.c.l.b16 %v650
    %v727 = vunpack.c.h.b16 %v650
    %v728 = vunpack.c.l.b16 %v651
    %v729 = vunpack.c.h.b16 %v651
    %v730 = vunpack.c.l.b16 %v652
    %v731 = vunpack.c.h.b16 %v652
    %v732 = vunpack.c.l.b16 %v653
    %v733 = vunpack.c.h.b16 %v653
    %v734 = vunpack.c.l.b16 %v654
    %v735 = vunpack.c.h.b16 %v654
    %v736 = vunpack.c.l.b16 %v655
    %v737 = vunpack.c.h.b16 %v655
    %v738 = vunpack.c.l.b16 %v656
    %v739 = vunpack.c.h.b16 %v656
    %v740 = vunpack.c.l.b16 %v657
    %v741 = vunpack.c.h.b16 %v657
    %v742 = vunpack.c.l.b16 %v658
    %v743 = vunpack.c.h.b16 %v658
    %v744 = vunpack.c.l.b16 %v659
    %v745 = vunpack.c.h.b16 %v659
    %v746 = vunpack.c.l.b16 %v660
    %v747 = vunpack.c.h.b16 %v660
    %v748 = vunpack.c.l.b16 %v661
    %v749 = vunpack.c.h.b16 %v661
    %v750 = vunpack.c.l.b16 %v662
    %v751 = vunpack.c.h.b16 %v662
    %v752 = vunpack.c.l.b16 %v663
    %v753 = vunpack.c.h.b16 %v663
    %v754 = vunpack.c.l.b16 %v664
    %v755 = vunpack.c.h.b16 %v664
    %v756 = vunpack.c.l.b16 %v665
    %v757 = vunpack.c.h.b16 %v665
    %v758 = vunpack.c.l.b16 %v666
    %v759 = vunpack.c.h.b16 %v666
    %v760 = vunpack.c.l.b16 %v667
    %v761 = vunpack.c.h.b16 %v667
    %v762 = vunpack.c.l.b16 %v668
    %v763 = vunpack.c.h.b16 %v668
    %v764 = vunpack.c.l.b16 %v669
    %v765 = vunpack.c.h.b16 %v669
    %v766 = vpack.c.b16 %v704, %v702
    %v767 = vpack.c.b16 %v705, %v703
    %v768 = vpack.c.b16 %v708, %v706
    %v769 = vpack.c.b16 %v709, %v707
    %v770 = vpack.c.b16 %v712, %v710
    %v771 = vpack.c.b16 %v713, %v711
    %v772 = vpack.c.b16 %v716, %v714
    %v773 = vpack.c.b16 %v717, %v715
    %v774 = vpack.c.b16 %v720, %v718
    %v775 = vpack.c.b16 %v721, %v719
    %v776 = vpack.c.b16 %v724, %v722
    %v777 = vpack.c.b16 %v725, %v723
    %v778 = vpack.c.b16 %v728, %v726
    %v779 = vpack.c.b16 %v729, %v727
    %v780 = vpack.c.b16 %v732, %v730
    %v781 = vpack.c.b16 %v733, %v731
    %v782 = vpack.c.b16 %v736, %v734
    %v783 = vpack.c.b16 %v737, %v735
    %v784 = vpack.c.b16 %v740, %v738
    %v785 = vpack.c.b16 %v741, %v739
    %v786 = vpack.c.b16 %v744, %v742
    %v787 = vpack.c.b16 %v745, %v743
    %v788 = vpack.c.b16 %v748, %v746
    %v789 = vpack.c.b16 %v749, %v747
    %v790 = vpack.c.b16 %v752, %v750
    %v791 = vpack.c.b16 %v753, %v751
    %v792 = vpack.c.b16 %v756, %v754
    %v793 = vpack.c.b16 %v757, %v755
    %v794 = vpack.c.b16 %v760, %v758
    %v795 = vpack.c.b16 %v761, %v759
    %v796 = vpack.c.b16 %v764, %v762
    %v797 = vpack.c.b16 %v765, %v763
    %830 = vmatprep.subr.bf16.mxu0 %v767
    %831 = vmatpush1.bf16.msra.mxu0 %v766
    %832 = vmatprep.subr.bf16.mxu0 %v769
    %833 = vmatpush1.bf16.msra.mxu0 %v768
    %834 = vmatprep.subr.bf16.mxu0 %v771
    %835 = vmatpush1.bf16.msra.mxu0 %v770
    %836 = vmatprep.subr.bf16.mxu0 %v773
    %837 = vmatpush1.bf16.msra.mxu0 %v772
    %838 = vmatprep.subr.bf16.mxu0 %v775
    %839 = vmatpush1.bf16.msra.mxu0 %v774
    %840 = vmatprep.subr.bf16.mxu0 %v777
    %841 = vmatpush1.bf16.msra.mxu0 %v776
    %842 = vmatprep.subr.bf16.mxu0 %v779
    %843 = vmatpush1.bf16.msra.mxu0 %v778
    %844 = vmatprep.subr.bf16.mxu0 %v781
    %845 = vmatpush1.bf16.msra.mxu0 %v780
    %846 = vmatprep.subr.bf16.mxu0 %v783
    %847 = vmatpush1.bf16.msra.mxu0 %v782
    %848 = vmatprep.subr.bf16.mxu0 %v785
    %849 = vmatpush1.bf16.msra.mxu0 %v784
    %850 = vmatprep.subr.bf16.mxu0 %v787
    %851 = vmatpush1.bf16.msra.mxu0 %v786
    %852 = vmatprep.subr.bf16.mxu0 %v789
    %853 = vmatpush1.bf16.msra.mxu0 %v788
    %854 = vmatprep.subr.bf16.mxu0 %v791
    %855 = vmatpush1.bf16.msra.mxu0 %v790
    %856 = vmatprep.subr.bf16.mxu0 %v793
    %857 = vmatpush1.bf16.msra.mxu0 %v792
    %858 = vmatprep.subr.bf16.mxu0 %v795
    %859 = vmatpush1.bf16.msra.mxu0 %v794
    %860 = vmatprep.subr.bf16.mxu0 %v797
    %861 = vmatpush1.bf16.msra.mxu0 %v796
    %862 = vmatprep.mubr.bf16.mxu0 %v404
    %863 = vmatmul.mubr.bf16.gmra.mrb[0].mxu0 %v403
    %v864 = vpop.f32.mrb[0].mxu0
    %v865 = vadd.f32 0.0, %v864
    %v866 = vpop.f32.mrb[0].mxu0
    %v867 = vadd.f32 0.0, %v866
    %v868 = vpop.f32.mrb[0].mxu0
    %v869 = vpop.f32.mrb[0].mxu0
    %870 = vdwg.mxu0
    %v871 = vpack.c.bf16 %v632, %v632
    %v872 = vpack.c.bf16 %v634, %v634
    %v873 = vld [vmem:[%s6] sm:$0x3]
    %v875 = vlaneseq
    %v876 = vshrl.u32 %v875, 7
    %v877 = vsub.s32 0, %v876
    %v878 = vrot.slane %v873, %v877
    %v879 = vlaneseq
    %v880 = vshrl.u32 %v879, 7
    %v881 = vsub.s32 1, %v880
    %v882 = vrot.slane %v873, %v881
    %v885 = vpack.c.bf16 %v878, %v878
    %v886 = vpack.c.bf16 %v882, %v882
    %v888 = vpack.i.b16 %v885, %v885
    %v890 = vlaneseq
    %v891 = vshrl.u32 %v890, 7
    %v892 = vsub.s32 0, %v891
    %v893 = vrot.slane %v888, %v892
    %v895 = vpack.i.b16 %v886, %v886
    %v897 = vlaneseq
    %v898 = vshrl.u32 %v897, 7
    %v899 = vsub.s32 0, %v898
    %v900 = vrot.slane %v895, %v899
    %v901 = vadd.bf16 %v871, %v893
    %v902 = vadd.bf16 %v872, %v900
    %v903 = vmax.bf16 %v901, 0
    %v904 = vmax.bf16 %v902, 0
    %v905 = vpack.c.bf16 %v865, %v865
    %v906 = vpack.c.bf16 %v867, %v867
    %v907 = vld [vmem:[%s8] sm:$0x3]
    %v909 = vlaneseq
    %v910 = vshrl.u32 %v909, 7
    %v911 = vsub.s32 0, %v910
    %v912 = vrot.slane %v907, %v911
    %v913 = vlaneseq
    %v914 = vshrl.u32 %v913, 7
    %v915 = vsub.s32 1, %v914
    %v916 = vrot.slane %v907, %v915
    %v919 = vpack.c.bf16 %v912, %v912
    %v920 = vpack.c.bf16 %v916, %v916
    %v922 = vpack.i.b16 %v919, %v919
    %v924 = vlaneseq
    %v925 = vshrl.u32 %v924, 7
    %v926 = vsub.s32 0, %v925
    %v927 = vrot.slane %v922, %v926
    %v929 = vpack.i.b16 %v920, %v920
    %v931 = vlaneseq
    %v932 = vshrl.u32 %v931, 7
    %v933 = vsub.s32 0, %v932
    %v934 = vrot.slane %v929, %v933
    %v935 = vadd.bf16 %v905, %v927
    %v936 = vadd.bf16 %v906, %v934
    %v937 = vmax.bf16 %v935, 0
    %v938 = vmax.bf16 %v936, 0
    %v939 = vld [vmem:[%s9] sm:$0xf]
    %v940 = vld [vmem:[%s9 + $0x4] sm:$0xf]
    %v941 = vld [vmem:[%s9 + $0x8] sm:$0xf]
    %v942 = vld [vmem:[%s9 + $0xc] sm:$0xf]
    %v943 = vld [vmem:[%s9 + $0x10] sm:$0xf]
    %v944 = vld [vmem:[%s9 + $0x14] sm:$0xf]
    %v945 = vld [vmem:[%s9 + $0x18] sm:$0xf]
    %v946 = vld [vmem:[%s9 + $0x1c] sm:$0xf]
    %v947 = vld [vmem:[%s9 + $0x20] sm:$0xf]
    %v948 = vld [vmem:[%s9 + $0x24] sm:$0xf]
    %v949 = vld [vmem:[%s9 + $0x28] sm:$0xf]
    %v950 = vld [vmem:[%s9 + $0x2c] sm:$0xf]
    %v951 = vld [vmem:[%s9 + $0x30] sm:$0xf]
    %v952 = vld [vmem:[%s9 + $0x34] sm:$0xf]
    %v953 = vld [vmem:[%s9 + $0x38] sm:$0xf]
    %v954 = vld [vmem:[%s9 + $0x3c] sm:$0xf]
    %v955 = vld [vmem:[%s9 + $0x40] sm:$0xf]
    %v956 = vld [vmem:[%s9 + $0x44] sm:$0xf]
    %v957 = vld [vmem:[%s9 + $0x48] sm:$0xf]
    %v958 = vld [vmem:[%s9 + $0x4c] sm:$0xf]
    %v959 = vld [vmem:[%s9 + $0x50] sm:$0xf]
    %v960 = vld [vmem:[%s9 + $0x54] sm:$0xf]
    %v961 = vld [vmem:[%s9 + $0x58] sm:$0xf]
    %v962 = vld [vmem:[%s9 + $0x5c] sm:$0xf]
    %v963 = vld [vmem:[%s9 + $0x60] sm:$0xf]
    %v964 = vld [vmem:[%s9 + $0x64] sm:$0xf]
    %v965 = vld [vmem:[%s9 + $0x68] sm:$0xf]
    %v966 = vld [vmem:[%s9 + $0x6c] sm:$0xf]
    %v967 = vld [vmem:[%s9 + $0x70] sm:$0xf]
    %v968 = vld [vmem:[%s9 + $0x74] sm:$0xf]
    %v969 = vld [vmem:[%s9 + $0x78] sm:$0xf]
    %v970 = vld [vmem:[%s9 + $0x7c] sm:$0xf]
    %v971 = vld [vmem:[%s9 + $0x80] sm:$0xf]
    %v972 = vld [vmem:[%s9 + $0x84] sm:$0xf]
    %v973 = vld [vmem:[%s9 + $0x88] sm:$0xf]
    %v974 = vld [vmem:[%s9 + $0x8c] sm:$0xf]
    %v975 = vld [vmem:[%s9 + $0x90] sm:$0xf]
    %v976 = vld [vmem:[%s9 + $0x94] sm:$0xf]
    %v977 = vld [vmem:[%s9 + $0x98] sm:$0xf]
    %v978 = vld [vmem:[%s9 + $0x9c] sm:$0xf]
    %v979 = vld [vmem:[%s9 + $0xa0] sm:$0xf]
    %v980 = vld [vmem:[%s9 + $0xa4] sm:$0xf]
    %v981 = vld [vmem:[%s9 + $0xa8] sm:$0xf]
    %v982 = vld [vmem:[%s9 + $0xac] sm:$0xf]
    %v983 = vld [vmem:[%s9 + $0xb0] sm:$0xf]
    %v984 = vld [vmem:[%s9 + $0xb4] sm:$0xf]
    %v985 = vld [vmem:[%s9 + $0xb8] sm:$0xf]
    %v986 = vld [vmem:[%s9 + $0xbc] sm:$0xf]
    %v987 = vld [vmem:[%s9 + $0xc0] sm:$0xf]
    %v988 = vld [vmem:[%s9 + $0xc4] sm:$0xf]
    %v989 = vld [vmem:[%s9 + $0xc8] sm:$0xf]
    %v990 = vld [vmem:[%s9 + $0xcc] sm:$0xf]
    %v991 = vld [vmem:[%s9 + $0xd0] sm:$0xf]
    %v992 = vld [vmem:[%s9 + $0xd4] sm:$0xf]
    %v993 = vld [vmem:[%s9 + $0xd8] sm:$0xf]
    %v994 = vld [vmem:[%s9 + $0xdc] sm:$0xf]
    %v995 = vld [vmem:[%s9 + $0xe0] sm:$0xf]
    %v996 = vld [vmem:[%s9 + $0xe4] sm:$0xf]
    %v997 = vld [vmem:[%s9 + $0xe8] sm:$0xf]
    %v998 = vld [vmem:[%s9 + $0xec] sm:$0xf]
    %v999 = vld [vmem:[%s9 + $0xf0] sm:$0xf]
    %v1000 = vld [vmem:[%s9 + $0xf4] sm:$0xf]
    %v1001 = vld [vmem:[%s9 + $0xf8] sm:$0xf]
    %v1002 = vld [vmem:[%s9 + $0xfc] sm:$0xf]
    %v1003 = vld [vmem:[%s10] sm:$0x1]
    %v1005 = vlaneseq
    %v1006 = vshrl.u32 %v1005, 7
    %v1007 = vsub.s32 0, %v1006
    %v1008 = vrot.slane %v1003, %v1007
    %v1074 = vunpack.c.l.b16 %v939
    %v1075 = vunpack.c.l.b16 %v940
    %v1076 = vunpack.c.l.b16 %v941
    %v1077 = vunpack.c.l.b16 %v942
    %v1078 = vunpack.c.l.b16 %v943
    %v1079 = vunpack.c.l.b16 %v944
    %v1080 = vunpack.c.l.b16 %v945
    %v1081 = vunpack.c.l.b16 %v946
    %v1082 = vunpack.c.l.b16 %v947
    %v1083 = vunpack.c.l.b16 %v948
    %v1084 = vunpack.c.l.b16 %v949
    %v1085 = vunpack.c.l.b16 %v950
    %v1086 = vunpack.c.l.b16 %v951
    %v1087 = vunpack.c.l.b16 %v952
    %v1088 = vunpack.c.l.b16 %v953
    %v1089 = vunpack.c.l.b16 %v954
    %v1090 = vunpack.c.l.b16 %v955
    %v1091 = vunpack.c.l.b16 %v956
    %v1092 = vunpack.c.l.b16 %v957
    %v1093 = vunpack.c.l.b16 %v958
    %v1094 = vunpack.c.l.b16 %v959
    %v1095 = vunpack.c.l.b16 %v960
    %v1096 = vunpack.c.l.b16 %v961
    %v1097 = vunpack.c.l.b16 %v962
    %v1098 = vunpack.c.l.b16 %v963
    %v1099 = vunpack.c.l.b16 %v964
    %v1100 = vunpack.c.l.b16 %v965
    %v1101 = vunpack.c.l.b16 %v966
    %v1102 = vunpack.c.l.b16 %v967
    %v1103 = vunpack.c.l.b16 %v968
    %v1104 = vunpack.c.l.b16 %v969
    %v1105 = vunpack.c.l.b16 %v970
    %v1106 = vunpack.c.l.b16 %v971
    %v1107 = vunpack.c.l.b16 %v972
    %v1108 = vunpack.c.l.b16 %v973
    %v1109 = vunpack.c.l.b16 %v974
    %v1110 = vunpack.c.l.b16 %v975
    %v1111 = vunpack.c.l.b16 %v976
    %v1112 = vunpack.c.l.b16 %v977
    %v1113 = vunpack.c.l.b16 %v978
    %v1114 = vunpack.c.l.b16 %v979
    %v1115 = vunpack.c.l.b16 %v980
    %v1116 = vunpack.c.l.b16 %v981
    %v1117 = vunpack.c.l.b16 %v982
    %v1118 = vunpack.c.l.b16 %v983
    %v1119 = vunpack.c.l.b16 %v984
    %v1120 = vunpack.c.l.b16 %v985
    %v1121 = vunpack.c.l.b16 %v986
    %v1122 = vunpack.c.l.b16 %v987
    %v1123 = vunpack.c.l.b16 %v988
    %v1124 = vunpack.c.l.b16 %v989
    %v1125 = vunpack.c.l.b16 %v990
    %v1126 = vunpack.c.l.b16 %v991
    %v1127 = vunpack.c.l.b16 %v992
    %v1128 = vunpack.c.l.b16 %v993
    %v1129 = vunpack.c.l.b16 %v994
    %v1130 = vunpack.c.l.b16 %v995
    %v1131 = vunpack.c.l.b16 %v996
    %v1132 = vunpack.c.l.b16 %v997
    %v1133 = vunpack.c.l.b16 %v998
    %v1134 = vunpack.c.l.b16 %v999
    %v1135 = vunpack.c.l.b16 %v1000
    %v1136 = vunpack.c.l.b16 %v1001
    %v1137 = vunpack.c.l.b16 %v1002
    %v1138 = vpack.c.b16 %v1075, %v1074
    %v1139 = vpack.c.b16 %v1077, %v1076
    %v1140 = vpack.c.b16 %v1079, %v1078
    %v1141 = vpack.c.b16 %v1081, %v1080
    %v1142 = vpack.c.b16 %v1083, %v1082
    %v1143 = vpack.c.b16 %v1085, %v1084
    %v1144 = vpack.c.b16 %v1087, %v1086
    %v1145 = vpack.c.b16 %v1089, %v1088
    %v1146 = vpack.c.b16 %v1091, %v1090
    %v1147 = vpack.c.b16 %v1093, %v1092
    %v1148 = vpack.c.b16 %v1095, %v1094
    %v1149 = vpack.c.b16 %v1097, %v1096
    %v1150 = vpack.c.b16 %v1099, %v1098
    %v1151 = vpack.c.b16 %v1101, %v1100
    %v1152 = vpack.c.b16 %v1103, %v1102
    %v1153 = vpack.c.b16 %v1105, %v1104
    %v1154 = vpack.c.b16 %v1107, %v1106
    %v1155 = vpack.c.b16 %v1109, %v1108
    %v1156 = vpack.c.b16 %v1111, %v1110
    %v1157 = vpack.c.b16 %v1113, %v1112
    %v1158 = vpack.c.b16 %v1115, %v1114
    %v1159 = vpack.c.b16 %v1117, %v1116
    %v1160 = vpack.c.b16 %v1119, %v1118
    %v1161 = vpack.c.b16 %v1121, %v1120
    %v1162 = vpack.c.b16 %v1123, %v1122
    %v1163 = vpack.c.b16 %v1125, %v1124
    %v1164 = vpack.c.b16 %v1127, %v1126
    %v1165 = vpack.c.b16 %v1129, %v1128
    %v1166 = vpack.c.b16 %v1131, %v1130
    %v1167 = vpack.c.b16 %v1133, %v1132
    %v1168 = vpack.c.b16 %v1135, %v1134
    %v1169 = vpack.c.b16 %v1137, %v1136
    %1202 = vmatprep.subr.bf16.mxu0 0
    %1203 = vmatpush1.bf16.msra.mxu0 %v1138
    %1204 = vmatprep.subr.bf16.mxu0 0
    %1205 = vmatpush1.bf16.msra.mxu0 %v1139
    %1206 = vmatprep.subr.bf16.mxu0 0
    %1207 = vmatpush1.bf16.msra.mxu0 %v1140
    %1208 = vmatprep.subr.bf16.mxu0 0
    %1209 = vmatpush1.bf16.msra.mxu0 %v1141
    %1210 = vmatprep.subr.bf16.mxu0 0
    %1211 = vmatpush1.bf16.msra.mxu0 %v1142
    %1212 = vmatprep.subr.bf16.mxu0 0
    %1213 = vmatpush1.bf16.msra.mxu0 %v1143
    %1214 = vmatprep.subr.bf16.mxu0 0
    %1215 = vmatpush1.bf16.msra.mxu0 %v1144
    %1216 = vmatprep.subr.bf16.mxu0 0
    %1217 = vmatpush1.bf16.msra.mxu0 %v1145
    %1218 = vmatprep.subr.bf16.mxu0 0
    %1219 = vmatpush1.bf16.msra.mxu0 %v1146
    %1220 = vmatprep.subr.bf16.mxu0 0
    %1221 = vmatpush1.bf16.msra.mxu0 %v1147
    %1222 = vmatprep.subr.bf16.mxu0 0
    %1223 = vmatpush1.bf16.msra.mxu0 %v1148
    %1224 = vmatprep.subr.bf16.mxu0 0
    %1225 = vmatpush1.bf16.msra.mxu0 %v1149
    %1226 = vmatprep.subr.bf16.mxu0 0
    %1227 = vmatpush1.bf16.msra.mxu0 %v1150
    %1228 = vmatprep.subr.bf16.mxu0 0
    %1229 = vmatpush1.bf16.msra.mxu0 %v1151
    %1230 = vmatprep.subr.bf16.mxu0 0
    %1231 = vmatpush1.bf16.msra.mxu0 %v1152
    %1232 = vmatprep.subr.bf16.mxu0 0
    %1233 = vmatpush1.bf16.msra.mxu0 %v1153
    %1234 = vmatprep.mubr.bf16.mxu0 %v904
    %1235 = vmatmul.mubr.bf16.gmra.mrb[0].mxu0 %v903
    %v1236 = vpop.f32.mrb[0].mxu0
    %v1237 = vadd.f32 %v1008, %v1236
    %v1238 = vpop.f32.mrb[0].mxu0
    %v1239 = vpop.f32.mrb[0].mxu0
    %v1240 = vpop.f32.mrb[0].mxu0
    %1241 = vdwg.mxu0
    %1242 = vmatprep.subr.bf16.mxu0 0
    %1243 = vmatpush1.bf16.msra.mxu0 %v1154
    %1244 = vmatprep.subr.bf16.mxu0 0
    %1245 = vmatpush1.bf16.msra.mxu0 %v1155
    %1246 = vmatprep.subr.bf16.mxu0 0
    %1247 = vmatpush1.bf16.msra.mxu0 %v1156
    %1248 = vmatprep.subr.bf16.mxu0 0
    %1249 = vmatpush1.bf16.msra.mxu0 %v1157
    %1250 = vmatprep.subr.bf16.mxu0 0
    %1251 = vmatpush1.bf16.msra.mxu0 %v1158
    %1252 = vmatprep.subr.bf16.mxu0 0
    %1253 = vmatpush1.bf16.msra.mxu0 %v1159
    %1254 = vmatprep.subr.bf16.mxu0 0
    %1255 = vmatpush1.bf16.msra.mxu0 %v1160
    %1256 = vmatprep.subr.bf16.mxu0 0
    %1257 = vmatpush1.bf16.msra.mxu0 %v1161
    %1258 = vmatprep.subr.bf16.mxu0 0
    %1259 = vmatpush1.bf16.msra.mxu0 %v1162
    %1260 = vmatprep.subr.bf16.mxu0 0
    %1261 = vmatpush1.bf16.msra.mxu0 %v1163
    %1262 = vmatprep.subr.bf16.mxu0 0
    %1263 = vmatpush1.bf16.msra.mxu0 %v1164
    %1264 = vmatprep.subr.bf16.mxu0 0
    %1265 = vmatpush1.bf16.msra.mxu0 %v1165
    %1266 = vmatprep.subr.bf16.mxu0 0
    %1267 = vmatpush1.bf16.msra.mxu0 %v1166
    %1268 = vmatprep.subr.bf16.mxu0 0
    %1269 = vmatpush1.bf16.msra.mxu0 %v1167
    %1270 = vmatprep.subr.bf16.mxu0 0
    %1271 = vmatpush1.bf16.msra.mxu0 %v1168
    %1272 = vmatprep.subr.bf16.mxu0 0
    %1273 = vmatpush1.bf16.msra.mxu0 %v1169
    %1274 = vmatprep.mubr.bf16.mxu0 %v938
    %1275 = vmatmul.mubr.bf16.gmra.mrb[0].mxu0 %v937
    %v1276 = vpop.f32.mrb[0].mxu0
    %v1277 = vadd.f32 %v1237, %v1276
    %v1278 = vpop.f32.mrb[0].mxu0
    %v1279 = vpop.f32.mrb[0].mxu0
    %v1280 = vpop.f32.mrb[0].mxu0
    %1281 = vdwg.mxu0
    %vm1282 = vcmask 15360
    %1283 = vst.msk [vmem:[%s11] sm:$0xff] %vm1282, %v1277
    // Predicated region
    $region62: #{_critic_forward_impl.1} parent=1 // pred_check
      _
    $region63: #{_critic_forward_impl.1} parent=1 // pred_check_branch
      %1285 = sbr.rel (0) target = $region65
    $region64: #{_critic_forward_impl.1} parent=1 // pred_region
      _
    $region65: #{_critic_forward_impl.1} parent=1 // pred_fallthru
      _
    // Predicated region
    $region66: #{_critic_forward_impl.1} parent=1 // pred_check
      _
    $region67: #{_critic_forward_impl.1} parent=1 // pred_check_branch
      %1287 = sbr.rel (0) target = $region69
    $region68: #{_critic_forward_impl.1} parent=1 // pred_region
      _
    $region69: #{_critic_forward_impl.1} parent=1 // pred_fallthru
      _
    %1288 = vsyncpa [#allocation3], 1
    %1289 = vsyncpa [#allocation5], 1
    %1290 = vsyncpa [#allocation8], 1

</llo_original>
